<compile_context>
chip_gen: v7x
topology: tpu7x:2x2x1
jax: 0.10.0
libtpu: 0.0.40
codegen_flags: <defaults>
</compile_context>

<pallas_src>
import functools
from collections import OrderedDict

import jax
import jax.numpy as jnp
from jax.experimental import pallas as pl
from jax.experimental.pallas import tpu as pltpu


def _round_up(x, m):
    return ((x + m - 1) // m) * m


def _dedup_live_taps(dilations, H, W):
    """Group live 3x3 taps by spatial shift (dh, dw).

    Drops taps whose shift falls fully on the zero padding (|dh|>=H or |dw|>=W) and
    merges taps from different branches sharing the same shift (their weights are
    summed in the wrapper — exact, conv is linear in the weights).
    """
    groups = OrderedDict()
    for bi, d in enumerate(dilations):
        for kh in range(3):
            for kw in range(3):
                dh, dw = (kh - 1) * d, (kw - 1) * d
                if abs(dh) < H and abs(dw) < W:
                    groups.setdefault((dh, dw), []).append((bi, kh, kw))
    return list(groups.items())


def _make_kernel(shifts, H, W, HW, Cin_pad, NoLabels, guard, S_pad, G, compute_dtype):
    n_taps = len(shifts)
    starts = [guard + dh * W + dw for (dh, dw) in shifts]
    dws = [dw for (_, dw) in shifts]
    tail = S_pad - guard - HW

    def kernel(x_ref, w_ref, b_ref, o_ref, pad_ref, col_ref):
        # x_ref  : (1, G, Cin_pad, HW)        un-padded flat images of this batch group
        # w_ref  : (NoLabels, n_taps*Cin_pad) fused (dedup'd, branch-summed) weights
        # b_ref  : (NoLabels, 1)              bias pre-summed over branches (f32)
        # o_ref  : (1, NoLabels, G*HW)        lane-dense channels-first output
        # pad_ref: (Cin_pad, S_pad)           flat image with zero guard regions (VMEM)
        # col_ref: (n_taps*Cin_pad, G*HW)     im2col scratch (VMEM)

        # W-boundary masks, hoisted out of the tap loop and pre-broadcast to the full
        # (Cin_pad, HW) tile so each masked tap is a single select (JAX does not CSE
        # broadcast_in_dim; per-tap (1,HW) masks would re-broadcast ~n_taps times).
        masks = {}
        nonzero_dws = sorted({dw for dw in dws if dw != 0})
        if nonzero_dws:
            wcol = jax.lax.broadcasted_iota(jnp.int32, (Cin_pad, HW), 1) % W
            for dw in nonzero_dws:
                masks[dw] = (wcol + dw >= 0) & (wcol + dw < W)
        zeros_blk = jnp.zeros((Cin_pad, HW), compute_dtype)

        # Zero the guard regions of the padded-image scratch.  Done every step (not
        # only at program_id==0): under megacore sharding each core has its own
        # scratch and may never execute step 0.  The interior is rewritten per batch
        # below, so the guards stay valid zeros.
        if guard > 0:
            pad_ref[:, :guard] = jnp.zeros((Cin_pad, guard), compute_dtype)
        if tail > 0:
            pad_ref[:, guard + HW:] = jnp.zeros((Cin_pad, tail), compute_dtype)

        for g in range(G):
            # Realize the conv's zero padding in VMEM (no HBM-inflating jnp.pad in
            # the wrapper): copy the flat image into the lane-aligned interior.
            pad_ref[:, guard:guard + HW] = x_ref[0, g]
            # Build this batch's slab of the im2col matrix: every dilated tap is a
            # contiguous lane-dense slice of the padded flat image.
            for t, (s, dw) in enumerate(zip(starts, dws)):
                win = pad_ref[:, s:s + HW]                       # (Cin_pad, HW)
                if dw != 0:                                      # zero W wrap-around
                    win = jnp.where(masks[dw], win, zeros_blk)
                col_ref[t * Cin_pad:(t + 1) * Cin_pad, g * HW:(g + 1) * HW] = win

        # One fused MXU matmul over K = n_taps*Cin_pad, accumulated in f32.
        acc = jnp.dot(w_ref[...], col_ref[...], preferred_element_type=jnp.float32)
        acc = acc + b_ref[...]                                   # broadcast over lanes
        o_ref[...] = acc.reshape(1, NoLabels, G * HW).astype(o_ref.dtype)

    return kernel


@functools.partial(jax.jit,
                   static_argnames=("dilations", "compute_dtype", "batches_per_step"))
def classifier_module_pallas(x_nchw, weights, biases, dilations,
                             compute_dtype=jnp.float32, batches_per_step=None):
    """Sum of dilated 3x3 convs (Classifier_Module.forward).

    x_nchw : (B, Cin, H, W)
    weights: (n_branches, 3, 3, Cin, NoLabels)  (HWIO per branch)
    biases : (n_branches, NoLabels)
    Returns (B, NoLabels, H, W).
    """
    B, Cin, H, W = x_nchw.shape
    NoLabels = weights.shape[-1]
    HW = H * W
    out_dtype = x_nchw.dtype

    # ---- static tap bookkeeping: dead-tap pruning + duplicate-shift merging -------
    tap_groups = _dedup_live_taps(tuple(dilations), H, W)
    shifts = [k for k, _ in tap_groups]
    n_taps = len(shifts)

    # Sublane packing so every (Cin_pad, HW) tap slab store in col_ref is tile-aligned.
    pack = 16 if jnp.dtype(compute_dtype).itemsize == 2 else 8
    Cin_pad = _round_up(Cin, pack)
    K = n_taps * Cin_pad

    # Flat-spatial guard, rounded to the lane width so the interior copy and the head
    # zeroing are lane-aligned.  Sized from the largest *live* shift only.
    max_off = max(abs(dh) * W + abs(dw) for (dh, dw) in shifts)
    guard = _round_up(max_off, 128) if max_off > 0 else 0
    S_pad = _round_up(guard + HW + guard, 128)

    # ---- batch grouping: fold G batches into the matmul's lane dimension ----------
    # Default keeps (up to) 2 grid steps so both v7x TensorCores get work while
    # capping serial per-step overhead on single-TC chips; pass batches_per_step=B
    # to fully fold the batch (grid=(1,)) on v5e/v6e.
    G = batches_per_step if batches_per_step is not None else max(1, (B + 1) // 2)
    G = max(1, min(G, B))
    num_groups = -(-B // G)
    B_pad = num_groups * G

    # ---- operands (no spatial jnp.pad; padding realized in VMEM) -------------------
    x_flat = x_nchw.reshape(B, Cin, HW).astype(compute_dtype)
    if Cin_pad > Cin:
        x_flat = jnp.pad(x_flat, ((0, 0), (0, Cin_pad - Cin), (0, 0)))
    if B_pad > B:
        x_flat = jnp.pad(x_flat, ((0, B_pad - B), (0, 0), (0, 0)))
    x_grp = x_flat.reshape(num_groups, G, Cin_pad, HW)

    # Fused weights: one (Cin, NoLabels) slab per distinct shift, summed over the
    # branches that share the shift.  Column order = tap-major / cin-minor, matching
    # the im2col slab.
    w_taps = jnp.stack([
        sum(weights[bi, kh, kw] for (bi, kh, kw) in members)
        for (_, members) in tap_groups
    ])                                                        # (n_taps, Cin, NoLabels)
    if Cin_pad > Cin:
        w_taps = jnp.pad(w_taps, ((0, 0), (0, Cin_pad - Cin), (0, 0)))
    w_fused = jnp.transpose(w_taps, (2, 0, 1)).reshape(NoLabels, K).astype(compute_dtype)

    # Bias hoisted out of the kernel: each conv's bias is added exactly once.
    bias_total = jnp.sum(biases.astype(jnp.float32), axis=0).reshape(NoLabels, 1)

    kernel = _make_kernel(shifts, H, W, HW, Cin_pad, NoLabels, guard, S_pad, G,
                          compute_dtype)

    # Scoped-VMEM budget: only raise the limit when the default would be exceeded,
    # and stay under v7x's 64 MiB physical VMEM.
    it = jnp.dtype(compute_dtype).itemsize
    vmem_est = (2 * G * Cin_pad * HW * it                       # double-buffered input
                + 2 * NoLabels * G * HW * jnp.dtype(out_dtype).itemsize
                + Cin_pad * S_pad * it                          # padded-image scratch
                + K * G * HW * it                               # im2col scratch
                + 2 * NoLabels * K * it + 4 * NoLabels)
    vmem_limit = int(vmem_est * 1.3)
    vmem_limit = min(vmem_limit, 48 << 20) if vmem_limit > (16 << 20) else None

    out = pl.pallas_call(
        kernel,
        out_shape=jax.ShapeDtypeStruct((num_groups, NoLabels, G * HW), out_dtype),
        grid=(num_groups,),
        in_specs=[
            pl.BlockSpec((1, G, Cin_pad, HW), lambda i: (i, 0, 0, 0)),
            pl.BlockSpec((NoLabels, K), lambda i: (0, 0)),
            pl.BlockSpec((NoLabels, 1), lambda i: (0, 0)),
        ],
        out_specs=pl.BlockSpec((1, NoLabels, G * HW), lambda i: (i, 0, 0)),
        scratch_shapes=[
            pltpu.VMEM((Cin_pad, S_pad), compute_dtype),        # padded flat image
            pltpu.VMEM((K, G * HW), compute_dtype),             # im2col slab
        ],
        compiler_params=pltpu.CompilerParams(
            dimension_semantics=("parallel",),
            vmem_limit_bytes=vmem_limit),
    )(x_grp, w_fused, bias_total)

    # (num_groups, NoLabels, G*HW) -> (B, NoLabels, H, W).  Tiny wrapper-side
    # transpose; the kernel's store stays fully lane-dense.
    out = out.reshape(num_groups, NoLabels, G, H, W)
    out = jnp.transpose(out, (0, 2, 1, 3, 4)).reshape(B_pad, NoLabels, H, W)
    return out[:B]


def classifier_module_ref(x_nchw, weights, biases, dilations):
    """Pure-JAX reference matching the PyTorch forward (sum of dilated convs + biases)."""
    out = None
    for i, d in enumerate(dilations):
        o = jax.lax.conv_general_dilated(
            x_nchw, weights[i],
            window_strides=(1, 1),
            padding=((d, d), (d, d)),
            rhs_dilation=(d, d),
            dimension_numbers=("NCHW", "HWIO", "NCHW"),
        )
        o = o + biases[i][None, :, None, None]
        out = o if out is None else out + o
    return out


if __name__ == "__main__":
    # Small shapes consistent with the module: ASPP head with 4 dilated branches.
    B, Cin, H, W = 2, 32, 16, 16
    NoLabels = 8
    dilation_series = (6, 12, 18, 24)   # padding_series == dilation_series in AVSegFormer
    nb = len(dilation_series)

    key = jax.random.PRNGKey(0)
    kx, kw, kb = jax.random.split(key, 3)

    x = jax.random.normal(kx, (B, Cin, H, W), dtype=jnp.float32)
    # Conv weights: normal_(0, 0.01) as in __init__; stored HWIO per branch.
    weights = 0.01 * jax.random.normal(kw, (nb, 3, 3, Cin, NoLabels), dtype=jnp.float32)
    # PyTorch default conv bias init: U(-1/sqrt(fan_in), 1/sqrt(fan_in)), fan_in = Cin*9.
    bound = 1.0 / (Cin * 9) ** 0.5
    biases = jax.random.uniform(kb, (nb, NoLabels), dtype=jnp.float32,
                                minval=-bound, maxval=bound)

    ref = classifier_module_ref(x, weights, biases, dilation_series)

    # Default: f32 operands, grid=(2,) over batch groups (keeps both v7x TCs busy).
    out = jax.block_until_ready(
        classifier_module_pallas(x, weights, biases, dilation_series))
    assert out.shape == (B, NoLabels, H, W)
    assert jnp.allclose(out, ref, atol=1e-2, rtol=1e-2), "f32 kernel mismatch vs reference"

    # Batch fully folded into lanes (grid=(1,)): the single-TC (v5e/v6e) configuration.
    out_folded = jax.block_until_ready(
        classifier_module_pallas(x, weights, biases, dilation_series,
                                 batches_per_step=B))
    assert jnp.allclose(out_folded, ref, atol=1e-2, rtol=1e-2), "folded-batch mismatch"

    # bf16 operands (f32 accumulation) for MXU throughput on v6e/v7x.
    out_bf16 = jax.block_until_ready(
        classifier_module_pallas(x, weights, biases, dilation_series,
                                 compute_dtype=jnp.bfloat16))
    assert jnp.allclose(out_bf16, ref, atol=2e-2, rtol=2e-2), "bf16 kernel mismatch"

    print("KERNEL_OK")
</pallas_src>

<mosaic_0001>
module attributes {stable_mosaic.version = 11 : i64} {
  func.func @kernel(%arg0: i32, %arg1: memref<1x1x32x256xf32, #tpu.memory_space<vmem>>, %arg2: memref<8x544xf32, #tpu.memory_space<vmem>>, %arg3: memref<8x1xf32, #tpu.memory_space<vmem>>, %arg4: memref<1x8x256xf32, #tpu.memory_space<vmem>>, %arg5: memref<32x768xf32, #tpu.memory_space<vmem>>, %arg6: memref<544x256xf32, #tpu.memory_space<vmem>>) attributes {dimension_semantics = [#tpu.dimension_semantics<parallel>], iteration_bounds = array<i64: 2>, scalar_prefetch = 0 : i64, scratch_operands = 2 : i64, tpu.core_type = #tpu.core_type<tc>, window_params = [{transform_indices = @transform_0, window_bounds = array<i64: 1, 1, 32, 256>}, {pipeline_mode = #tpu.pipeline_mode<synchronous>, transform_indices = @transform_1, window_bounds = array<i64: 8, 544>}, {pipeline_mode = #tpu.pipeline_mode<synchronous>, transform_indices = @transform_2, window_bounds = array<i64: 8, 1>}, {transform_indices = @transform_3, window_bounds = array<i64: 1, 8, 256>}]} {
    %0 = tpu.iota {dimensions = array<i32: 1>} : vector<32x256xi32>
    %c16_i32 = arith.constant 16 : i32
    %c0_i32 = arith.constant 0 : i32
    %1 = arith.cmpi eq, %c16_i32, %c0_i32 : i32
    %c1_i32 = arith.constant 1 : i32
    %2 = arith.select %1, %c1_i32, %c16_i32 : i32
    %3 = vector.broadcast %2 : i32 to vector<32x256xi32>
    %4 = arith.remsi %0, %3 : vector<32x256xi32>
    %c0_i32_0 = arith.constant 0 : i32
    %5 = vector.broadcast %c0_i32_0 : i32 to vector<32x256xi32>
    %6 = arith.cmpi ne, %4, %5 : vector<32x256xi32>
    %c0_i32_1 = arith.constant 0 : i32
    %7 = vector.broadcast %c0_i32_1 : i32 to vector<32x256xi32>
    %8 = arith.cmpi slt, %4, %7 : vector<32x256xi32>
    %c0_i32_2 = arith.constant 0 : i32
    %9 = arith.cmpi slt, %2, %c0_i32_2 : i32
    %10 = vector.broadcast %9 : i1 to vector<32x256xi1>
    %11 = vector.broadcast %10 : vector<32x256xi1> to vector<32x256xi1>
    %12 = arith.xori %8, %11 : vector<32x256xi1>
    %13 = arith.andi %12, %6 : vector<32x256xi1>
    %14 = vector.broadcast %2 : i32 to vector<32x256xi32>
    %15 = arith.addi %4, %14 : vector<32x256xi32>
    %16 = arith.select %13, %15, %4 : vector<32x256xi1>, vector<32x256xi32>
    %c-12_i32 = arith.constant -12 : i32
    %17 = vector.broadcast %c-12_i32 : i32 to vector<32x256xi32>
    %18 = arith.addi %16, %17 : vector<32x256xi32>
    %c0_i32_3 = arith.constant 0 : i32
    %19 = vector.broadcast %c0_i32_3 : i32 to vector<32x256xi32>
    %20 = arith.cmpi sge, %18, %19 : vector<32x256xi32>
    %c-12_i32_4 = arith.constant -12 : i32
    %21 = vector.broadcast %c-12_i32_4 : i32 to vector<32x256xi32>
    %22 = arith.addi %16, %21 : vector<32x256xi32>
    %c16_i32_5 = arith.constant 16 : i32
    %23 = vector.broadcast %c16_i32_5 : i32 to vector<32x256xi32>
    %24 = arith.cmpi slt, %22, %23 : vector<32x256xi32>
    %25 = arith.andi %20, %24 : vector<32x256xi1>
    %c-6_i32 = arith.constant -6 : i32
    %26 = vector.broadcast %c-6_i32 : i32 to vector<32x256xi32>
    %27 = arith.addi %16, %26 : vector<32x256xi32>
    %c0_i32_6 = arith.constant 0 : i32
    %28 = vector.broadcast %c0_i32_6 : i32 to vector<32x256xi32>
    %29 = arith.cmpi sge, %27, %28 : vector<32x256xi32>
    %c-6_i32_7 = arith.constant -6 : i32
    %30 = vector.broadcast %c-6_i32_7 : i32 to vector<32x256xi32>
    %31 = arith.addi %16, %30 : vector<32x256xi32>
    %c16_i32_8 = arith.constant 16 : i32
    %32 = vector.broadcast %c16_i32_8 : i32 to vector<32x256xi32>
    %33 = arith.cmpi slt, %31, %32 : vector<32x256xi32>
    %34 = arith.andi %29, %33 : vector<32x256xi1>
    %c6_i32 = arith.constant 6 : i32
    %35 = vector.broadcast %c6_i32 : i32 to vector<32x256xi32>
    %36 = arith.addi %16, %35 : vector<32x256xi32>
    %c0_i32_9 = arith.constant 0 : i32
    %37 = vector.broadcast %c0_i32_9 : i32 to vector<32x256xi32>
    %38 = arith.cmpi sge, %36, %37 : vector<32x256xi32>
    %c6_i32_10 = arith.constant 6 : i32
    %39 = vector.broadcast %c6_i32_10 : i32 to vector<32x256xi32>
    %40 = arith.addi %16, %39 : vector<32x256xi32>
    %c16_i32_11 = arith.constant 16 : i32
    %41 = vector.broadcast %c16_i32_11 : i32 to vector<32x256xi32>
    %42 = arith.cmpi slt, %40, %41 : vector<32x256xi32>
    %43 = arith.andi %38, %42 : vector<32x256xi1>
    %c12_i32 = arith.constant 12 : i32
    %44 = vector.broadcast %c12_i32 : i32 to vector<32x256xi32>
    %45 = arith.addi %16, %44 : vector<32x256xi32>
    %c0_i32_12 = arith.constant 0 : i32
    %46 = vector.broadcast %c0_i32_12 : i32 to vector<32x256xi32>
    %47 = arith.cmpi sge, %45, %46 : vector<32x256xi32>
    %c12_i32_13 = arith.constant 12 : i32
    %48 = vector.broadcast %c12_i32_13 : i32 to vector<32x256xi32>
    %49 = arith.addi %16, %48 : vector<32x256xi32>
    %c16_i32_14 = arith.constant 16 : i32
    %50 = vector.broadcast %c16_i32_14 : i32 to vector<32x256xi32>
    %51 = arith.cmpi slt, %49, %50 : vector<32x256xi32>
    %52 = arith.andi %47, %51 : vector<32x256xi1>
    %cst = arith.constant 0.000000e+00 : f32
    %53 = vector.broadcast %cst : f32 to vector<32x256xf32>
    %cst_15 = arith.constant 0.000000e+00 : f32
    %54 = vector.broadcast %cst_15 : f32 to vector<32x256xf32>
    %c0 = arith.constant 0 : index
    %c0_16 = arith.constant 0 : index
    %55 = vector.load %arg5[%c0, %c0_16] : memref<32x768xf32, #tpu.memory_space<vmem>>, vector<32x256xf32>
    tpu.vector_store %arg5[%c0, %c0_16], %54 {strides = array<i32>} : memref<32x768xf32, #tpu.memory_space<vmem>>, vector<32x256xf32>,
    %cst_17 = arith.constant 0.000000e+00 : f32
    %56 = vector.broadcast %cst_17 : f32 to vector<32x256xf32>
    %c0_18 = arith.constant 0 : index
    %c512 = arith.constant 512 : index
    %57 = vector.load %arg5[%c0_18, %c512] : memref<32x768xf32, #tpu.memory_space<vmem>>, vector<32x256xf32>
    tpu.vector_store %arg5[%c0_18, %c512], %56 {strides = array<i32>} : memref<32x768xf32, #tpu.memory_space<vmem>>, vector<32x256xf32>,
    %c0_19 = arith.constant 0 : index
    %c0_20 = arith.constant 0 : index
    %c0_21 = arith.constant 0 : index
    %c0_22 = arith.constant 0 : index
    %58 = vector.load %arg1[%c0_19, %c0_20, %c0_21, %c0_22] : memref<1x1x32x256xf32, #tpu.memory_space<vmem>>, vector<1x1x32x256xf32>
    %59 = vector.shape_cast %58 : vector<1x1x32x256xf32> to vector<32x256xf32>
    %c0_23 = arith.constant 0 : index
    %c256 = arith.constant 256 : index
    %60 = vector.load %arg5[%c0_23, %c256] : memref<32x768xf32, #tpu.memory_space<vmem>>, vector<32x256xf32>
    tpu.vector_store %arg5[%c0_23, %c256], %59 {strides = array<i32>} : memref<32x768xf32, #tpu.memory_space<vmem>>, vector<32x256xf32>,
    %c0_24 = arith.constant 0 : index
    %c154 = arith.constant 154 : index
    %61 = vector.load %arg5[%c0_24, %c154] : memref<32x768xf32, #tpu.memory_space<vmem>>, vector<32x256xf32>
    %62 = arith.select %34, %61, %53 : vector<32x256xi1>, vector<32x256xf32>
    %c0_25 = arith.constant 0 : index
    %c0_26 = arith.constant 0 : index
    %63 = vector.load %arg6[%c0_25, %c0_26] : memref<544x256xf32, #tpu.memory_space<vmem>>, vector<32x256xf32>
    tpu.vector_store %arg6[%c0_25, %c0_26], %62 {strides = array<i32>} : memref<544x256xf32, #tpu.memory_space<vmem>>, vector<32x256xf32>,
    %c0_27 = arith.constant 0 : index
    %c160 = arith.constant 160 : index
    %64 = vector.load %arg5[%c0_27, %c160] : memref<32x768xf32, #tpu.memory_space<vmem>>, vector<32x256xf32>
    %c32 = arith.constant 32 : index
    %c0_28 = arith.constant 0 : index
    %65 = vector.load %arg6[%c32, %c0_28] : memref<544x256xf32, #tpu.memory_space<vmem>>, vector<32x256xf32>
    tpu.vector_store %arg6[%c32, %c0_28], %64 {strides = array<i32>} : memref<544x256xf32, #tpu.memory_space<vmem>>, vector<32x256xf32>,
    %c0_29 = arith.constant 0 : index
    %c166 = arith.constant 166 : index
    %66 = vector.load %arg5[%c0_29, %c166] : memref<32x768xf32, #tpu.memory_space<vmem>>, vector<32x256xf32>
    %67 = arith.select %43, %66, %53 : vector<32x256xi1>, vector<32x256xf32>
    %c64 = arith.constant 64 : index
    %c0_30 = arith.constant 0 : index
    %68 = vector.load %arg6[%c64, %c0_30] : memref<544x256xf32, #tpu.memory_space<vmem>>, vector<32x256xf32>
    tpu.vector_store %arg6[%c64, %c0_30], %67 {strides = array<i32>} : memref<544x256xf32, #tpu.memory_space<vmem>>, vector<32x256xf32>,
    %c0_31 = arith.constant 0 : index
    %c250 = arith.constant 250 : index
    %69 = vector.load %arg5[%c0_31, %c250] : memref<32x768xf32, #tpu.memory_space<vmem>>, vector<32x256xf32>
    %70 = arith.select %34, %69, %53 : vector<32x256xi1>, vector<32x256xf32>
    %c96 = arith.constant 96 : index
    %c0_32 = arith.constant 0 : index
    %71 = vector.load %arg6[%c96, %c0_32] : memref<544x256xf32, #tpu.memory_space<vmem>>, vector<32x256xf32>
    tpu.vector_store %arg6[%c96, %c0_32], %70 {strides = array<i32>} : memref<544x256xf32, #tpu.memory_space<vmem>>, vector<32x256xf32>,
    %c0_33 = arith.constant 0 : index
    %c256_34 = arith.constant 256 : index
    %72 = vector.load %arg5[%c0_33, %c256_34] : memref<32x768xf32, #tpu.memory_space<vmem>>, vector<32x256xf32>
    %c128 = arith.constant 128 : index
    %c0_35 = arith.constant 0 : index
    %73 = vector.load %arg6[%c128, %c0_35] : memref<544x256xf32, #tpu.memory_space<vmem>>, vector<32x256xf32>
    tpu.vector_store %arg6[%c128, %c0_35], %72 {strides = array<i32>} : memref<544x256xf32, #tpu.memory_space<vmem>>, vector<32x256xf32>,
    %c0_36 = arith.constant 0 : index
    %c262 = arith.constant 262 : index
    %74 = vector.load %arg5[%c0_36, %c262] : memref<32x768xf32, #tpu.memory_space<vmem>>, vector<32x256xf32>
    %75 = arith.select %43, %74, %53 : vector<32x256xi1>, vector<32x256xf32>
    %c160_37 = arith.constant 160 : index
    %c0_38 = arith.constant 0 : index
    %76 = vector.load %arg6[%c160_37, %c0_38] : memref<544x256xf32, #tpu.memory_space<vmem>>, vector<32x256xf32>
    tpu.vector_store %arg6[%c160_37, %c0_38], %75 {strides = array<i32>} : memref<544x256xf32, #tpu.memory_space<vmem>>, vector<32x256xf32>,
    %c0_39 = arith.constant 0 : index
    %c346 = arith.constant 346 : index
    %77 = vector.load %arg5[%c0_39, %c346] : memref<32x768xf32, #tpu.memory_space<vmem>>, vector<32x256xf32>
    %78 = arith.select %34, %77, %53 : vector<32x256xi1>, vector<32x256xf32>
    %c192 = arith.constant 192 : index
    %c0_40 = arith.constant 0 : index
    %79 = vector.load %arg6[%c192, %c0_40] : memref<544x256xf32, #tpu.memory_space<vmem>>, vector<32x256xf32>
    tpu.vector_store %arg6[%c192, %c0_40], %78 {strides = array<i32>} : memref<544x256xf32, #tpu.memory_space<vmem>>, vector<32x256xf32>,
    %c0_41 = arith.constant 0 : index
    %c352 = arith.constant 352 : index
    %80 = vector.load %arg5[%c0_41, %c352] : memref<32x768xf32, #tpu.memory_space<vmem>>, vector<32x256xf32>
    %c224 = arith.constant 224 : index
    %c0_42 = arith.constant 0 : index
    %81 = vector.load %arg6[%c224, %c0_42] : memref<544x256xf32, #tpu.memory_space<vmem>>, vector<32x256xf32>
    tpu.vector_store %arg6[%c224, %c0_42], %80 {strides = array<i32>} : memref<544x256xf32, #tpu.memory_space<vmem>>, vector<32x256xf32>,
    %c0_43 = arith.constant 0 : index
    %c358 = arith.constant 358 : index
    %82 = vector.load %arg5[%c0_43, %c358] : memref<32x768xf32, #tpu.memory_space<vmem>>, vector<32x256xf32>
    %83 = arith.select %43, %82, %53 : vector<32x256xi1>, vector<32x256xf32>
    %c256_44 = arith.constant 256 : index
    %c0_45 = arith.constant 0 : index
    %84 = vector.load %arg6[%c256_44, %c0_45] : memref<544x256xf32, #tpu.memory_space<vmem>>, vector<32x256xf32>
    tpu.vector_store %arg6[%c256_44, %c0_45], %83 {strides = array<i32>} : memref<544x256xf32, #tpu.memory_space<vmem>>, vector<32x256xf32>,
    %c0_46 = arith.constant 0 : index
    %c52 = arith.constant 52 : index
    %85 = vector.load %arg5[%c0_46, %c52] : memref<32x768xf32, #tpu.memory_space<vmem>>, vector<32x256xf32>
    %86 = arith.select %25, %85, %53 : vector<32x256xi1>, vector<32x256xf32>
    %c288 = arith.constant 288 : index
    %c0_47 = arith.constant 0 : index
    %87 = vector.load %arg6[%c288, %c0_47] : memref<544x256xf32, #tpu.memory_space<vmem>>, vector<32x256xf32>
    tpu.vector_store %arg6[%c288, %c0_47], %86 {strides = array<i32>} : memref<544x256xf32, #tpu.memory_space<vmem>>, vector<32x256xf32>,
    %c0_48 = arith.constant 0 : index
    %c64_49 = arith.constant 64 : index
    %88 = vector.load %arg5[%c0_48, %c64_49] : memref<32x768xf32, #tpu.memory_space<vmem>>, vector<32x256xf32>
    %c320 = arith.constant 320 : index
    %c0_50 = arith.constant 0 : index
    %89 = vector.load %arg6[%c320, %c0_50] : memref<544x256xf32, #tpu.memory_space<vmem>>, vector<32x256xf32>
    tpu.vector_store %arg6[%c320, %c0_50], %88 {strides = array<i32>} : memref<544x256xf32, #tpu.memory_space<vmem>>, vector<32x256xf32>,
    %c0_51 = arith.constant 0 : index
    %c76 = arith.constant 76 : index
    %90 = vector.load %arg5[%c0_51, %c76] : memref<32x768xf32, #tpu.memory_space<vmem>>, vector<32x256xf32>
    %91 = arith.select %52, %90, %53 : vector<32x256xi1>, vector<32x256xf32>
    %c352_52 = arith.constant 352 : index
    %c0_53 = arith.constant 0 : index
    %92 = vector.load %arg6[%c352_52, %c0_53] : memref<544x256xf32, #tpu.memory_space<vmem>>, vector<32x256xf32>
    tpu.vector_store %arg6[%c352_52, %c0_53], %91 {strides = array<i32>} : memref<544x256xf32, #tpu.memory_space<vmem>>, vector<32x256xf32>,
    %c0_54 = arith.constant 0 : index
    %c244 = arith.constant 244 : index
    %93 = vector.load %arg5[%c0_54, %c244] : memref<32x768xf32, #tpu.memory_space<vmem>>, vector<32x256xf32>
    %94 = arith.select %25, %93, %53 : vector<32x256xi1>, vector<32x256xf32>
    %c384 = arith.constant 384 : index
    %c0_55 = arith.constant 0 : index
    %95 = vector.load %arg6[%c384, %c0_55] : memref<544x256xf32, #tpu.memory_space<vmem>>, vector<32x256xf32>
    tpu.vector_store %arg6[%c384, %c0_55], %94 {strides = array<i32>} : memref<544x256xf32, #tpu.memory_space<vmem>>, vector<32x256xf32>,
    %c0_56 = arith.constant 0 : index
    %c268 = arith.constant 268 : index
    %96 = vector.load %arg5[%c0_56, %c268] : memref<32x768xf32, #tpu.memory_space<vmem>>, vector<32x256xf32>
    %97 = arith.select %52, %96, %53 : vector<32x256xi1>, vector<32x256xf32>
    %c416 = arith.constant 416 : index
    %c0_57 = arith.constant 0 : index
    %98 = vector.load %arg6[%c416, %c0_57] : memref<544x256xf32, #tpu.memory_space<vmem>>, vector<32x256xf32>
    tpu.vector_store %arg6[%c416, %c0_57], %97 {strides = array<i32>} : memref<544x256xf32, #tpu.memory_space<vmem>>, vector<32x256xf32>,
    %c0_58 = arith.constant 0 : index
    %c436 = arith.constant 436 : index
    %99 = vector.load %arg5[%c0_58, %c436] : memref<32x768xf32, #tpu.memory_space<vmem>>, vector<32x256xf32>
    %100 = arith.select %25, %99, %53 : vector<32x256xi1>, vector<32x256xf32>
    %c448 = arith.constant 448 : index
    %c0_59 = arith.constant 0 : index
    %101 = vector.load %arg6[%c448, %c0_59] : memref<544x256xf32, #tpu.memory_space<vmem>>, vector<32x256xf32>
    tpu.vector_store %arg6[%c448, %c0_59], %100 {strides = array<i32>} : memref<544x256xf32, #tpu.memory_space<vmem>>, vector<32x256xf32>,
    %c0_60 = arith.constant 0 : index
    %c448_61 = arith.constant 448 : index
    %102 = vector.load %arg5[%c0_60, %c448_61] : memref<32x768xf32, #tpu.memory_space<vmem>>, vector<32x256xf32>
    %c480 = arith.constant 480 : index
    %c0_62 = arith.constant 0 : index
    %103 = vector.load %arg6[%c480, %c0_62] : memref<544x256xf32, #tpu.memory_space<vmem>>, vector<32x256xf32>
    tpu.vector_store %arg6[%c480, %c0_62], %102 {strides = array<i32>} : memref<544x256xf32, #tpu.memory_space<vmem>>, vector<32x256xf32>,
    %c0_63 = arith.constant 0 : index
    %c460 = arith.constant 460 : index
    %104 = vector.load %arg5[%c0_63, %c460] : memref<32x768xf32, #tpu.memory_space<vmem>>, vector<32x256xf32>
    %105 = arith.select %52, %104, %53 : vector<32x256xi1>, vector<32x256xf32>
    %c512_64 = arith.constant 512 : index
    %c0_65 = arith.constant 0 : index
    %106 = vector.load %arg6[%c512_64, %c0_65] : memref<544x256xf32, #tpu.memory_space<vmem>>, vector<32x256xf32>
    tpu.vector_store %arg6[%c512_64, %c0_65], %105 {strides = array<i32>} : memref<544x256xf32, #tpu.memory_space<vmem>>, vector<32x256xf32>,
    %c0_66 = arith.constant 0 : index
    %c0_67 = arith.constant 0 : index
    %107 = vector.load %arg2[%c0_66, %c0_67] : memref<8x544xf32, #tpu.memory_space<vmem>>, vector<8x544xf32>
    %c0_68 = arith.constant 0 : index
    %c0_69 = arith.constant 0 : index
    %108 = vector.load %arg6[%c0_68, %c0_69] : memref<544x256xf32, #tpu.memory_space<vmem>>, vector<544x256xf32>
    %cst_70 = arith.constant dense<0.000000e+00> : vector<8x256xf32>
    %109 = tpu.matmul %107, %108, %cst_70 {dimension_numbers = #tpu.dot_dimension_numbers<[1], [0], [0], [1], [0, 0, 1, 1], [], []>} : vector<8x544xf32>, vector<544x256xf32>, vector<8x256xf32> -> vector<8x256xf32>
    %c0_71 = arith.constant 0 : index
    %c0_72 = arith.constant 0 : index
    %110 = vector.load %arg3[%c0_71, %c0_72] : memref<8x1xf32, #tpu.memory_space<vmem>>, vector<8x1xf32>
    %111 = vector.broadcast %110 : vector<8x1xf32> to vector<8x256xf32>
    %112 = arith.addf %109, %111 : vector<8x256xf32>
    %113 = vector.shape_cast %112 : vector<8x256xf32> to vector<1x8x256xf32>
    %c0_73 = arith.constant 0 : index
    %c0_74 = arith.constant 0 : index
    %c0_75 = arith.constant 0 : index
    %114 = vector.load %arg4[%c0_73, %c0_74, %c0_75] : memref<1x8x256xf32, #tpu.memory_space<vmem>>, vector<1x8x256xf32>
    tpu.vector_store %arg4[%c0_73, %c0_74, %c0_75], %113 {strides = array<i32>} : memref<1x8x256xf32, #tpu.memory_space<vmem>>, vector<1x8x256xf32>,
    return
  }
  func.func @transform_0(%arg0: i32) -> (i32, i32, i32, i32) {
    %c0_i32 = arith.constant 0 : i32
    %c0_i32_0 = arith.constant 0 : i32
    %c0_i32_1 = arith.constant 0 : i32
    %c0_i32_2 = arith.constant 0 : i32
    return %arg0, %c0_i32, %c0_i32_0, %c0_i32_1 : i32, i32, i32, i32
  }
  func.func @transform_1(%arg0: i32) -> (i32, i32) {
    %c0_i32 = arith.constant 0 : i32
    %c0_i32_0 = arith.constant 0 : i32
    %c0_i32_1 = arith.constant 0 : i32
    return %c0_i32, %c0_i32_0 : i32, i32
  }
  func.func @transform_2(%arg0: i32) -> (i32, i32) {
    %c0_i32 = arith.constant 0 : i32
    %c0_i32_0 = arith.constant 0 : i32
    %c0_i32_1 = arith.constant 0 : i32
    return %c0_i32, %c0_i32_0 : i32, i32
  }
  func.func @transform_3(%arg0: i32) -> (i32, i32, i32) {
    %c0_i32 = arith.constant 0 : i32
    %c0_i32_0 = arith.constant 0 : i32
    %c0_i32_1 = arith.constant 0 : i32
    return %arg0, %c0_i32, %c0_i32_0 : i32, i32, i32
  }
}

</mosaic_0001>

<llo_original>
// kernel: classifier_module_pallas.1
$region0: #{classifier_module_pallas.1}
  #allocation0 [shape = 'u32[]', space=smem, size = 0x4, offset = 0x4, fixed_abs, tag = 'smem constant byte address 0x4 - core index']
  #allocation1 [shape = 'u32[144,128]{1,0:T(1,128)}', space=vmem, size = 0x12000, scoped, tag = 'internal scratch']
  #allocation2 [shape = 'f32[32,768]{1,0:T(8,128)}', space=vmem, size = 0x18000, scoped, tag = 'scratch operand']
  #allocation3 [shape = 'f32[544,256]{1,0:T(8,128)}', space=vmem, size = 0x88000, scoped, tag = 'scratch operand']
  %s0 = inlined_call_operand.vmem [shape: f32[2,1,32,256], index: 0, kind: input, shape index: {}]
  %s1 = inlined_call_operand.vmem [shape: f32[8,544], index: 1, kind: input, shape index: {}]
  %s2 = inlined_call_operand.vmem [shape: f32[8,1], index: 2, kind: input, shape index: {}]
  %s3 = inlined_call_operand.vmem [shape: f32[2,8,256], index: 3, kind: output, shape index: {}]
  %s4 = sld [smem:[#allocation0]]
  $region45: #{classifier_module_pallas.1} parent=0
    _
  %s6 = ssub.s32 1, %s4
  %s7 = scalar_select 0, %s6, %s4
  loop: start=0, step=1, limit=4
  $region2: #{classifier_module_pallas.1} parent=0 // loop_pre_header
    _
  $region3: #{classifier_module_pallas.1} parent=0 // loop_header
    %s9 = sphi 0, %s13
    %p10 = scmp.ge.s32.totalorder %s9, 4
    %s19 = sphi 0, %s21
    %s22 = sphi 0, %s19
    %s23 = sphi 0, %s22
    %s39 = sphi 0, %s23
    %s43 = sphi 0, %s43
    %s45 = sphi 0, %s43
    %s46 = sphi 0, %s45
    %s60 = sphi 0, %s46
    %s64 = sphi 0, %s64
    %s66 = sphi 0, %s64
    %s67 = sphi 0, %s66
    %s81 = sphi 0, %s67
    %s87 = sphi 0, %s89
    %s90 = sphi 0, %s87
    %s91 = sphi 0, %s90
    %s107 = sphi 0, %s91
  $region4: #{classifier_module_pallas.1} parent=0 // loop_header_branch
    %12 = sbr.rel (%p10) target = $region8
  $region5: #{classifier_module_pallas.1} parent=0 // loop_body
    %s14 = ssub.s32 %s9, 1
    %s15 = ssub.s32 %s9, 2
    %s16 = sadd.s32 %s9, 1
    %s17 = ssub.s32 %s9, %s16
    %p18 = scmp.eq.s32.totalorder %s17, 0
    %s20 = sadd.s32 %s19, 1
    %s21 = scalar_select %p18, %s19, %s20
    %p24 = pneg %p18
    %p25 = scmp.eq.s32.totalorder %s9, 1
    %p26 = por %p24, %p25
    %p27 = scmp.ne.s32.totalorder %s19, %s22
    %p28 = scmp.eq.s32.totalorder %s9, 0
    %p29 = por %p27, %p28
    %p30 = scmp.ne.s32.totalorder %s19, %s22
    %p31 = scmp.eq.s32.totalorder %s14, 1
    %p32 = por %p30, %p31
    %p33 = scmp.ne.s32.totalorder %s22, %s23
    %p34 = scmp.eq.s32.totalorder %s14, 0
    %p35 = por %p33, %p34
    %p36 = scmp.ne.s32.totalorder %s22, %s23
    %p37 = scmp.eq.s32.totalorder %s15, 1
    %p38 = por %p36, %p37
    %p40 = scmp.ne.s32.totalorder %s23, %s39
    %p41 = scmp.eq.s32.totalorder %s15, 0
    %p42 = por %p40, %p41
    %s44 = sadd.s32 %s43, 1
    %p47 = scmp.eq.s32.totalorder %s9, 1
    %p48 = scmp.ne.s32.totalorder %s43, %s45
    %p49 = scmp.eq.s32.totalorder %s9, 0
    %p50 = por %p48, %p49
    %p51 = scmp.ne.s32.totalorder %s43, %s45
    %p52 = scmp.eq.s32.totalorder %s14, 1
    %p53 = por %p51, %p52
    %p54 = scmp.ne.s32.totalorder %s45, %s46
    %p55 = scmp.eq.s32.totalorder %s14, 0
    %p56 = por %p54, %p55
    %p57 = scmp.ne.s32.totalorder %s45, %s46
    %p58 = scmp.eq.s32.totalorder %s15, 1
    %p59 = por %p57, %p58
    %p61 = scmp.ne.s32.totalorder %s46, %s60
    %p62 = scmp.eq.s32.totalorder %s15, 0
    %p63 = por %p61, %p62
    %s65 = sadd.s32 %s64, 1
    %p68 = scmp.eq.s32.totalorder %s9, 1
    %p69 = scmp.ne.s32.totalorder %s64, %s66
    %p70 = scmp.eq.s32.totalorder %s9, 0
    %p71 = por %p69, %p70
    %p72 = scmp.ne.s32.totalorder %s64, %s66
    %p73 = scmp.eq.s32.totalorder %s14, 1
    %p74 = por %p72, %p73
    %p75 = scmp.ne.s32.totalorder %s66, %s67
    %p76 = scmp.eq.s32.totalorder %s14, 0
    %p77 = por %p75, %p76
    %p78 = scmp.ne.s32.totalorder %s66, %s67
    %p79 = scmp.eq.s32.totalorder %s15, 1
    %p80 = por %p78, %p79
    %p82 = scmp.ne.s32.totalorder %s67, %s81
    %p83 = scmp.eq.s32.totalorder %s15, 0
    %p84 = por %p82, %p83
    %s85 = ssub.s32 %s9, %s16
    %p86 = scmp.eq.s32.totalorder %s85, 0
    %s88 = sadd.s32 %s87, 1
    %s89 = scalar_select %p86, %s87, %s88
    %p92 = pneg %p86
    %p93 = scmp.eq.s32.totalorder %s9, 1
    %p94 = por %p92, %p93
    %p95 = scmp.ne.s32.totalorder %s87, %s90
    %p96 = scmp.eq.s32.totalorder %s9, 0
    %p97 = por %p95, %p96
    %p98 = scmp.ne.s32.totalorder %s87, %s90
    %p99 = scmp.eq.s32.totalorder %s14, 1
    %p100 = por %p98, %p99
    %p101 = scmp.ne.s32.totalorder %s90, %s91
    %p102 = scmp.eq.s32.totalorder %s14, 0
    %p103 = por %p101, %p102
    %p104 = scmp.ne.s32.totalorder %s90, %s91
    %p105 = scmp.eq.s32.totalorder %s15, 1
    %p106 = por %p104, %p105
    %p108 = scmp.ne.s32.totalorder %s91, %s107
    %p109 = scmp.eq.s32.totalorder %s15, 0
    %p110 = por %p108, %p109
    %p111 = scmp.le.s32.totalorder 1, %s9
    %p112 = scmp.lt.s32.totalorder %s9, 3
    %p113 = pnand %p111, %p112
    %p114 = pneg %p113
    // Predicated region
    $region9: #{classifier_module_pallas.1} parent=5 // pred_check
      _
    $region10: #{classifier_module_pallas.1} parent=5 // pred_check_branch
      %116 = sbr.rel (%p113) target = $region12
    $region11: #{classifier_module_pallas.1} parent=5 // pred_region
      %s117 = ssub.s32 %s9, 1
      // Predicated region
      $region13: #{classifier_module_pallas.1} parent=11 // pred_check
        %p118 = pneg %p56
      $region14: #{classifier_module_pallas.1} parent=11 // pred_check_branch
        %120 = sbr.rel (%p118) target = $region16
      $region15: #{classifier_module_pallas.1} parent=11 // pred_region
        _
      $region16: #{classifier_module_pallas.1} parent=11 // pred_fallthru
        _
      // Predicated region
      $region17: #{classifier_module_pallas.1} parent=11 // pred_check
        %p121 = pneg %p77
      $region18: #{classifier_module_pallas.1} parent=11 // pred_check_branch
        %123 = sbr.rel (%p121) target = $region20
      $region19: #{classifier_module_pallas.1} parent=11 // pred_region
        _
      $region20: #{classifier_module_pallas.1} parent=11 // pred_fallthru
        _
    $region12: #{classifier_module_pallas.1} parent=5 // pred_fallthru
      _
    %p124 = scmp.lt.s32.totalorder %s9, 2
    // Predicated region
    $region21: #{classifier_module_pallas.1} parent=5 // pred_check
      %p125 = pneg %p124
    $region22: #{classifier_module_pallas.1} parent=5 // pred_check_branch
      %127 = sbr.rel (%p125) target = $region24
    $region23: #{classifier_module_pallas.1} parent=5 // pred_region
      // Predicated region
      $region25: #{classifier_module_pallas.1} parent=23 // pred_check
        %p128 = pneg %p29
      $region26: #{classifier_module_pallas.1} parent=23 // pred_check_branch
        %130 = sbr.rel (%p128) target = $region28
      $region27: #{classifier_module_pallas.1} parent=23 // pred_region
        %p131 = scmp.lt.s32.totalorder %s9, 1
        %s132 = scalar_select %p131, %s9, 1
        %s133 = smul.addr %s132, 8
        %s134 = smul.addr %s133, 8
        %s135 = scalar_lea.vmem %s0, %s134
      $region28: #{classifier_module_pallas.1} parent=23 // pred_fallthru
        _
    $region24: #{classifier_module_pallas.1} parent=5 // pred_fallthru
      _
    %p136 = scmp.le.s32.totalorder 1, %s9
    %p137 = scmp.lt.s32.totalorder %s9, 3
    %p138 = pnand %p136, %p137
    %p139 = pneg %p138
    // Predicated region
    $region29: #{classifier_module_pallas.1} parent=5 // pred_check
      _
    $region30: #{classifier_module_pallas.1} parent=5 // pred_check_branch
      %141 = sbr.rel (%p138) target = $region32
    $region31: #{classifier_module_pallas.1} parent=5 // pred_region
      %s142 = ssub.s32 %s9, 1
      %p143 = scmp.lt.s32.totalorder %s14, 1
      %s144 = scalar_select %p143, %s14, 1
      %s145 = smul.addr %s144, 8
      %s146 = smul.addr %s145, 8
      %s147 = scalar_lea.vmem %s0, %s146
      %p148 = pneg %p35
      %p149 = pneg %p32
      %p150 = pneg %p56
      %p151 = pneg %p53
      %p152 = pneg %p77
      %p153 = pneg %p74
      %p154 = pneg %p103
      %p155 = pneg %p100
      %p156 = scmp.lt.s32.totalorder %s14, 1
      %s157 = scalar_select %p156, %s14, 1
      %s158 = smul.addr %s157, 2
      %s159 = smul.addr %s158, 8
      %s160 = scalar_lea.vmem %s3, %s159
      %p161 = scmp.lt.s32.totalorder %s14, 1
      %s162 = scalar_select %p161, %s14, 1
      %s163 = smul.addr %s162, 8
      %s164 = smul.addr %s163, 8
      %s165 = scalar_lea.vmem %s0, %s164
      %p166 = scmp.lt.s32.totalorder %s14, 1
      %s167 = scalar_select %p166, %s14, 1
      %s168 = smul.addr %s167, 2
      %s169 = smul.addr %s168, 8
      %s170 = scalar_lea.vmem %s3, %s169
      %v171 = vlaneseq
      %v172 = vand.u32 %v171, 127
      %v173 = vadd.s32 %v172, 128
      %vm174 = vcmp.lt.s32.totalorder %v172, 0
      %v175 = vsub.s32 0, %v172
      %v176 = vsel %vm174, %v175, %v172
      %v177 = vshrl.u32 %v176, 4
      %v178 = vand.u32 %v176, 15
      %v179 = vsub.s32 0, %v178
      %v180 = vsel %vm174, %v179, %v178
      %vm181 = vcmp.lt.s32.totalorder %v173, 0
      %v182 = vsub.s32 0, %v173
      %v183 = vsel %vm181, %v182, %v173
      %v184 = vshrl.u32 %v183, 4
      %v185 = vand.u32 %v183, 15
      %v186 = vsub.s32 0, %v185
      %v187 = vsel %vm181, %v186, %v185
      %vm188 = vcmp.ne.s32.totalorder %v180, 0
      %vm189 = vcmp.ne.s32.totalorder %v187, 0
      %vm190 = vcmp.lt.s32.totalorder %v180, 0
      %vm191 = vcmp.lt.s32.totalorder %v187, 0
      %vm192 = vmand %vm190, %vm188
      %vm193 = vmand %vm191, %vm189
      %v194 = vadd.s32 %v180, 16
      %v195 = vadd.s32 %v187, 16
      %v196 = vsel %vm192, %v194, %v180
      %v197 = vsel %vm193, %v195, %v187
      %v198 = vadd.s32 %v196, 4294967284
      %v199 = vadd.s32 %v197, 4294967284
      %vm200 = vcmp.ge.s32.totalorder %v198, 0
      %vm201 = vcmp.ge.s32.totalorder %v199, 0
      %vm202 = vcmp.lt.s32.totalorder %v198, 16
      %vm203 = vcmp.lt.s32.totalorder %v199, 16
      %vm204 = vmand %vm200, %vm202
      %vm205 = vmand %vm201, %vm203
      %v206 = vadd.s32 %v196, 4294967290
      %v207 = vadd.s32 %v197, 4294967290
      %vm208 = vcmp.ge.s32.totalorder %v206, 0
      %vm209 = vcmp.ge.s32.totalorder %v207, 0
      %vm210 = vcmp.lt.s32.totalorder %v206, 16
      %vm211 = vcmp.lt.s32.totalorder %v207, 16
      %vm212 = vmand %vm208, %vm210
      %vm213 = vmand %vm209, %vm211
      %v214 = vadd.s32 %v196, 6
      %v215 = vadd.s32 %v197, 6
      %vm216 = vcmp.ge.s32.totalorder %v214, 0
      %vm217 = vcmp.ge.s32.totalorder %v215, 0
      %vm218 = vcmp.lt.s32.totalorder %v214, 16
      %vm219 = vcmp.lt.s32.totalorder %v215, 16
      %vm220 = vmand %vm216, %vm218
      %vm221 = vmand %vm217, %vm219
      %v222 = vadd.s32 %v196, 12
      %v223 = vadd.s32 %v197, 12
      %vm224 = vcmp.ge.s32.totalorder %v222, 0
      %vm225 = vcmp.ge.s32.totalorder %v223, 0
      %vm226 = vcmp.lt.s32.totalorder %v222, 16
      %vm227 = vcmp.lt.s32.totalorder %v223, 16
      %vm228 = vmand %vm224, %vm226
      %vm229 = vmand %vm225, %vm227
      %230 = vst [vmem:[#allocation2] sm:$0xff] 0.0
      %231 = vst [vmem:[#allocation2 + $0x8] sm:$0xff] 0.0
      %232 = vst [vmem:[#allocation2 + $0x30] sm:$0xff] 0.0
      %233 = vst [vmem:[#allocation2 + $0x38] sm:$0xff] 0.0
      %234 = vst [vmem:[#allocation2 + $0x60] sm:$0xff] 0.0
      %235 = vst [vmem:[#allocation2 + $0x68] sm:$0xff] 0.0
      %236 = vst [vmem:[#allocation2 + $0x90] sm:$0xff] 0.0
      %237 = vst [vmem:[#allocation2 + $0x98] sm:$0xff] 0.0
      %238 = vst [vmem:[#allocation2 + $0x20] sm:$0xff] 0.0
      %239 = vst [vmem:[#allocation2 + $0x28] sm:$0xff] 0.0
      %240 = vst [vmem:[#allocation2 + $0x50] sm:$0xff] 0.0
      %241 = vst [vmem:[#allocation2 + $0x58] sm:$0xff] 0.0
      %242 = vst [vmem:[#allocation2 + $0x80] sm:$0xff] 0.0
      %243 = vst [vmem:[#allocation2 + $0x88] sm:$0xff] 0.0
      %244 = vst [vmem:[#allocation2 + $0xb0] sm:$0xff] 0.0
      %245 = vst [vmem:[#allocation2 + $0xb8] sm:$0xff] 0.0
      %v246 = vld [vmem:[%s165] sm:$0xff]
      %v247 = vld [vmem:[%s165 + $0x8] sm:$0xff]
      %v248 = vld [vmem:[%s165 + $0x10] sm:$0xff]
      %v249 = vld [vmem:[%s165 + $0x18] sm:$0xff]
      %v250 = vld [vmem:[%s165 + $0x20] sm:$0xff]
      %v251 = vld [vmem:[%s165 + $0x28] sm:$0xff]
      %v252 = vld [vmem:[%s165 + $0x30] sm:$0xff]
      %v253 = vld [vmem:[%s165 + $0x38] sm:$0xff]
      %254 = vst [vmem:[#allocation2 + $0x10] sm:$0xff] %v246
      %255 = vst [vmem:[#allocation2 + $0x18] sm:$0xff] %v247
      %256 = vst [vmem:[#allocation2 + $0x40] sm:$0xff] %v248
      %257 = vst [vmem:[#allocation2 + $0x48] sm:$0xff] %v249
      %258 = vst [vmem:[#allocation2 + $0x70] sm:$0xff] %v250
      %259 = vst [vmem:[#allocation2 + $0x78] sm:$0xff] %v251
      %260 = vst [vmem:[#allocation2 + $0xa0] sm:$0xff] %v252
      %261 = vst [vmem:[#allocation2 + $0xa8] sm:$0xff] %v253
      %v262 = vld [vmem:[#allocation2 + $0x8] sm:$0xff]
      %v263 = vld [vmem:[#allocation2 + $0x10] sm:$0xff]
      %v264 = vld [vmem:[#allocation2 + $0x18] sm:$0xff]
      %v265 = vld [vmem:[#allocation2 + $0x38] sm:$0xff]
      %v266 = vld [vmem:[#allocation2 + $0x40] sm:$0xff]
      %v267 = vld [vmem:[#allocation2 + $0x48] sm:$0xff]
      %v268 = vld [vmem:[#allocation2 + $0x68] sm:$0xff]
      %v269 = vld [vmem:[#allocation2 + $0x70] sm:$0xff]
      %v270 = vld [vmem:[#allocation2 + $0x78] sm:$0xff]
      %v271 = vld [vmem:[#allocation2 + $0x98] sm:$0xff]
      %v272 = vld [vmem:[#allocation2 + $0xa0] sm:$0xff]
      %v273 = vld [vmem:[#allocation2 + $0xa8] sm:$0xff]
      %286 = vrot.lane.b32.xlu0 %v262, 102
      %v287 = vpop.permute.xlu0 %286
      %288 = vrot.lane.b32.xlu0 %v263, 102
      %v289 = vpop.permute.xlu0 %288
      %290 = vrot.lane.b32.xlu0 %v264, 102
      %v291 = vpop.permute.xlu0 %290
      %292 = vrot.lane.b32.xlu0 %v265, 102
      %v293 = vpop.permute.xlu0 %292
      %294 = vrot.lane.b32.xlu0 %v266, 102
      %v295 = vpop.permute.xlu0 %294
      %296 = vrot.lane.b32.xlu0 %v267, 102
      %v297 = vpop.permute.xlu0 %296
      %298 = vrot.lane.b32.xlu0 %v268, 102
      %v299 = vpop.permute.xlu0 %298
      %300 = vrot.lane.b32.xlu0 %v269, 102
      %v301 = vpop.permute.xlu0 %300
      %302 = vrot.lane.b32.xlu0 %v270, 102
      %v303 = vpop.permute.xlu0 %302
      %304 = vrot.lane.b32.xlu0 %v271, 102
      %v305 = vpop.permute.xlu0 %304
      %306 = vrot.lane.b32.xlu0 %v272, 102
      %v307 = vpop.permute.xlu0 %306
      %308 = vrot.lane.b32.xlu0 %v273, 102
      %v309 = vpop.permute.xlu0 %308
      %vm310 = vcmask 834560
      %v311 = vsel %vm310, %v287, %v289
      %v312 = vsel %vm310, %v289, %v291
      %v313 = vsel %vm310, %v293, %v295
      %v314 = vsel %vm310, %v295, %v297
      %v315 = vsel %vm310, %v299, %v301
      %v316 = vsel %vm310, %v301, %v303
      %v317 = vsel %vm310, %v305, %v307
      %v318 = vsel %vm310, %v307, %v309
      %v327 = vsel %vm212, %v311, 0.0
      %v328 = vsel %vm213, %v312, 0.0
      %v329 = vsel %vm212, %v313, 0.0
      %v330 = vsel %vm213, %v314, 0.0
      %v331 = vsel %vm212, %v315, 0.0
      %v332 = vsel %vm213, %v316, 0.0
      %v333 = vsel %vm212, %v317, 0.0
      %v334 = vsel %vm213, %v318, 0.0
      %335 = vst [vmem:[#allocation3] sm:$0xff] %v327
      %336 = vst [vmem:[#allocation3 + $0x8] sm:$0xff] %v328
      %337 = vst [vmem:[#allocation3 + $0x10] sm:$0xff] %v329
      %338 = vst [vmem:[#allocation3 + $0x18] sm:$0xff] %v330
      %339 = vst [vmem:[#allocation3 + $0x20] sm:$0xff] %v331
      %340 = vst [vmem:[#allocation3 + $0x28] sm:$0xff] %v332
      %341 = vst [vmem:[#allocation3 + $0x30] sm:$0xff] %v333
      %342 = vst [vmem:[#allocation3 + $0x38] sm:$0xff] %v334
      %v343 = vld [vmem:[#allocation2 + $0x8] sm:$0xff]
      %v344 = vld [vmem:[#allocation2 + $0x10] sm:$0xff]
      %v345 = vld [vmem:[#allocation2 + $0x18] sm:$0xff]
      %v346 = vld [vmem:[#allocation2 + $0x38] sm:$0xff]
      %v347 = vld [vmem:[#allocation2 + $0x40] sm:$0xff]
      %v348 = vld [vmem:[#allocation2 + $0x48] sm:$0xff]
      %v349 = vld [vmem:[#allocation2 + $0x68] sm:$0xff]
      %v350 = vld [vmem:[#allocation2 + $0x70] sm:$0xff]
      %v351 = vld [vmem:[#allocation2 + $0x78] sm:$0xff]
      %v352 = vld [vmem:[#allocation2 + $0x98] sm:$0xff]
      %v353 = vld [vmem:[#allocation2 + $0xa0] sm:$0xff]
      %v354 = vld [vmem:[#allocation2 + $0xa8] sm:$0xff]
      %367 = vrot.lane.b32.xlu0 %v343, 96
      %v368 = vpop.permute.xlu0 %367
      %369 = vrot.lane.b32.xlu0 %v344, 96
      %v370 = vpop.permute.xlu0 %369
      %371 = vrot.lane.b32.xlu0 %v345, 96
      %v372 = vpop.permute.xlu0 %371
      %373 = vrot.lane.b32.xlu0 %v346, 96
      %v374 = vpop.permute.xlu0 %373
      %375 = vrot.lane.b32.xlu0 %v347, 96
      %v376 = vpop.permute.xlu0 %375
      %377 = vrot.lane.b32.xlu0 %v348, 96
      %v378 = vpop.permute.xlu0 %377
      %379 = vrot.lane.b32.xlu0 %v349, 96
      %v380 = vpop.permute.xlu0 %379
      %381 = vrot.lane.b32.xlu0 %v350, 96
      %v382 = vpop.permute.xlu0 %381
      %383 = vrot.lane.b32.xlu0 %v351, 96
      %v384 = vpop.permute.xlu0 %383
      %385 = vrot.lane.b32.xlu0 %v352, 96
      %v386 = vpop.permute.xlu0 %385
      %387 = vrot.lane.b32.xlu0 %v353, 96
      %v388 = vpop.permute.xlu0 %387
      %389 = vrot.lane.b32.xlu0 %v354, 96
      %v390 = vpop.permute.xlu0 %389
      %vm391 = vcmask 785408
      %v392 = vsel %vm391, %v368, %v370
      %v393 = vsel %vm391, %v370, %v372
      %v394 = vsel %vm391, %v374, %v376
      %v395 = vsel %vm391, %v376, %v378
      %v396 = vsel %vm391, %v380, %v382
      %v397 = vsel %vm391, %v382, %v384
      %v398 = vsel %vm391, %v386, %v388
      %v399 = vsel %vm391, %v388, %v390
      %408 = vst [vmem:[#allocation3 + $0x40] sm:$0xff] %v392
      %409 = vst [vmem:[#allocation3 + $0x48] sm:$0xff] %v393
      %410 = vst [vmem:[#allocation3 + $0x50] sm:$0xff] %v394
      %411 = vst [vmem:[#allocation3 + $0x58] sm:$0xff] %v395
      %412 = vst [vmem:[#allocation3 + $0x60] sm:$0xff] %v396
      %413 = vst [vmem:[#allocation3 + $0x68] sm:$0xff] %v397
      %414 = vst [vmem:[#allocation3 + $0x70] sm:$0xff] %v398
      %415 = vst [vmem:[#allocation3 + $0x78] sm:$0xff] %v399
      %v416 = vld [vmem:[#allocation2 + $0x8] sm:$0xff]
      %v417 = vld [vmem:[#allocation2 + $0x10] sm:$0xff]
      %v418 = vld [vmem:[#allocation2 + $0x18] sm:$0xff]
      %v419 = vld [vmem:[#allocation2 + $0x38] sm:$0xff]
      %v420 = vld [vmem:[#allocation2 + $0x40] sm:$0xff]
      %v421 = vld [vmem:[#allocation2 + $0x48] sm:$0xff]
      %v422 = vld [vmem:[#allocation2 + $0x68] sm:$0xff]
      %v423 = vld [vmem:[#allocation2 + $0x70] sm:$0xff]
      %v424 = vld [vmem:[#allocation2 + $0x78] sm:$0xff]
      %v425 = vld [vmem:[#allocation2 + $0x98] sm:$0xff]
      %v426 = vld [vmem:[#allocation2 + $0xa0] sm:$0xff]
      %v427 = vld [vmem:[#allocation2 + $0xa8] sm:$0xff]
      %440 = vrot.lane.b32.xlu0 %v416, 90
      %v441 = vpop.permute.xlu0 %440
      %442 = vrot.lane.b32.xlu0 %v417, 90
      %v443 = vpop.permute.xlu0 %442
      %444 = vrot.lane.b32.xlu0 %v418, 90
      %v445 = vpop.permute.xlu0 %444
      %446 = vrot.lane.b32.xlu0 %v419, 90
      %v447 = vpop.permute.xlu0 %446
      %448 = vrot.lane.b32.xlu0 %v420, 90
      %v449 = vpop.permute.xlu0 %448
      %450 = vrot.lane.b32.xlu0 %v421, 90
      %v451 = vpop.permute.xlu0 %450
      %452 = vrot.lane.b32.xlu0 %v422, 90
      %v453 = vpop.permute.xlu0 %452
      %454 = vrot.lane.b32.xlu0 %v423, 90
      %v455 = vpop.permute.xlu0 %454
      %456 = vrot.lane.b32.xlu0 %v424, 90
      %v457 = vpop.permute.xlu0 %456
      %458 = vrot.lane.b32.xlu0 %v425, 90
      %v459 = vpop.permute.xlu0 %458
      %460 = vrot.lane.b32.xlu0 %v426, 90
      %v461 = vpop.permute.xlu0 %460
      %462 = vrot.lane.b32.xlu0 %v427, 90
      %v463 = vpop.permute.xlu0 %462
      %vm464 = vcmask 736256
      %v465 = vsel %vm464, %v441, %v443
      %v466 = vsel %vm464, %v443, %v445
      %v467 = vsel %vm464, %v447, %v449
      %v468 = vsel %vm464, %v449, %v451
      %v469 = vsel %vm464, %v453, %v455
      %v470 = vsel %vm464, %v455, %v457
      %v471 = vsel %vm464, %v459, %v461
      %v472 = vsel %vm464, %v461, %v463
      %v481 = vsel %vm220, %v465, 0.0
      %v482 = vsel %vm221, %v466, 0.0
      %v483 = vsel %vm220, %v467, 0.0
      %v484 = vsel %vm221, %v468, 0.0
      %v485 = vsel %vm220, %v469, 0.0
      %v486 = vsel %vm221, %v470, 0.0
      %v487 = vsel %vm220, %v471, 0.0
      %v488 = vsel %vm221, %v472, 0.0
      %489 = vst [vmem:[#allocation3 + $0x80] sm:$0xff] %v481
      %490 = vst [vmem:[#allocation3 + $0x88] sm:$0xff] %v482
      %491 = vst [vmem:[#allocation3 + $0x90] sm:$0xff] %v483
      %492 = vst [vmem:[#allocation3 + $0x98] sm:$0xff] %v484
      %493 = vst [vmem:[#allocation3 + $0xa0] sm:$0xff] %v485
      %494 = vst [vmem:[#allocation3 + $0xa8] sm:$0xff] %v486
      %495 = vst [vmem:[#allocation3 + $0xb0] sm:$0xff] %v487
      %496 = vst [vmem:[#allocation3 + $0xb8] sm:$0xff] %v488
      %v497 = vld [vmem:[#allocation2 + $0x8] sm:$0xff]
      %v498 = vld [vmem:[#allocation2 + $0x10] sm:$0xff]
      %v499 = vld [vmem:[#allocation2 + $0x18] sm:$0xff]
      %v500 = vld [vmem:[#allocation2 + $0x38] sm:$0xff]
      %v501 = vld [vmem:[#allocation2 + $0x40] sm:$0xff]
      %v502 = vld [vmem:[#allocation2 + $0x48] sm:$0xff]
      %v503 = vld [vmem:[#allocation2 + $0x68] sm:$0xff]
      %v504 = vld [vmem:[#allocation2 + $0x70] sm:$0xff]
      %v505 = vld [vmem:[#allocation2 + $0x78] sm:$0xff]
      %v506 = vld [vmem:[#allocation2 + $0x98] sm:$0xff]
      %v507 = vld [vmem:[#allocation2 + $0xa0] sm:$0xff]
      %v508 = vld [vmem:[#allocation2 + $0xa8] sm:$0xff]
      %521 = vrot.lane.b32.xlu0 %v497, 6
      %v522 = vpop.permute.xlu0 %521
      %523 = vrot.lane.b32.xlu0 %v498, 6
      %v524 = vpop.permute.xlu0 %523
      %525 = vrot.lane.b32.xlu0 %v499, 6
      %v526 = vpop.permute.xlu0 %525
      %527 = vrot.lane.b32.xlu0 %v500, 6
      %v528 = vpop.permute.xlu0 %527
      %529 = vrot.lane.b32.xlu0 %v501, 6
      %v530 = vpop.permute.xlu0 %529
      %531 = vrot.lane.b32.xlu0 %v502, 6
      %v532 = vpop.permute.xlu0 %531
      %533 = vrot.lane.b32.xlu0 %v503, 6
      %v534 = vpop.permute.xlu0 %533
      %535 = vrot.lane.b32.xlu0 %v504, 6
      %v536 = vpop.permute.xlu0 %535
      %537 = vrot.lane.b32.xlu0 %v505, 6
      %v538 = vpop.permute.xlu0 %537
      %539 = vrot.lane.b32.xlu0 %v506, 6
      %v540 = vpop.permute.xlu0 %539
      %541 = vrot.lane.b32.xlu0 %v507, 6
      %v542 = vpop.permute.xlu0 %541
      %543 = vrot.lane.b32.xlu0 %v508, 6
      %v544 = vpop.permute.xlu0 %543
      %vm545 = vcmask 48128
      %v546 = vsel %vm545, %v522, %v524
      %v547 = vsel %vm545, %v524, %v526
      %v548 = vsel %vm545, %v528, %v530
      %v549 = vsel %vm545, %v530, %v532
      %v550 = vsel %vm545, %v534, %v536
      %v551 = vsel %vm545, %v536, %v538
      %v552 = vsel %vm545, %v540, %v542
      %v553 = vsel %vm545, %v542, %v544
      %v562 = vsel %vm212, %v546, 0.0
      %v563 = vsel %vm213, %v547, 0.0
      %v564 = vsel %vm212, %v548, 0.0
      %v565 = vsel %vm213, %v549, 0.0
      %v566 = vsel %vm212, %v550, 0.0
      %v567 = vsel %vm213, %v551, 0.0
      %v568 = vsel %vm212, %v552, 0.0
      %v569 = vsel %vm213, %v553, 0.0
      %570 = vst [vmem:[#allocation3 + $0xc0] sm:$0xff] %v562
      %571 = vst [vmem:[#allocation3 + $0xc8] sm:$0xff] %v563
      %572 = vst [vmem:[#allocation3 + $0xd0] sm:$0xff] %v564
      %573 = vst [vmem:[#allocation3 + $0xd8] sm:$0xff] %v565
      %574 = vst [vmem:[#allocation3 + $0xe0] sm:$0xff] %v566
      %575 = vst [vmem:[#allocation3 + $0xe8] sm:$0xff] %v567
      %576 = vst [vmem:[#allocation3 + $0xf0] sm:$0xff] %v568
      %577 = vst [vmem:[#allocation3 + $0xf8] sm:$0xff] %v569
      %v578 = vld [vmem:[#allocation2 + $0x10] sm:$0xff]
      %v579 = vld [vmem:[#allocation2 + $0x18] sm:$0xff]
      %v580 = vld [vmem:[#allocation2 + $0x40] sm:$0xff]
      %v581 = vld [vmem:[#allocation2 + $0x48] sm:$0xff]
      %v582 = vld [vmem:[#allocation2 + $0x70] sm:$0xff]
      %v583 = vld [vmem:[#allocation2 + $0x78] sm:$0xff]
      %v584 = vld [vmem:[#allocation2 + $0xa0] sm:$0xff]
      %v585 = vld [vmem:[#allocation2 + $0xa8] sm:$0xff]
      %586 = vst [vmem:[#allocation3 + $0x100] sm:$0xff] %v578
      %587 = vst [vmem:[#allocation3 + $0x108] sm:$0xff] %v579
      %588 = vst [vmem:[#allocation3 + $0x110] sm:$0xff] %v580
      %589 = vst [vmem:[#allocation3 + $0x118] sm:$0xff] %v581
      %590 = vst [vmem:[#allocation3 + $0x120] sm:$0xff] %v582
      %591 = vst [vmem:[#allocation3 + $0x128] sm:$0xff] %v583
      %592 = vst [vmem:[#allocation3 + $0x130] sm:$0xff] %v584
      %593 = vst [vmem:[#allocation3 + $0x138] sm:$0xff] %v585
      %v594 = vld [vmem:[#allocation2 + $0x10] sm:$0xff]
      %v595 = vld [vmem:[#allocation2 + $0x18] sm:$0xff]
      %v596 = vld [vmem:[#allocation2 + $0x20] sm:$0xff]
      %v597 = vld [vmem:[#allocation2 + $0x40] sm:$0xff]
      %v598 = vld [vmem:[#allocation2 + $0x48] sm:$0xff]
      %v599 = vld [vmem:[#allocation2 + $0x50] sm:$0xff]
      %v600 = vld [vmem:[#allocation2 + $0x70] sm:$0xff]
      %v601 = vld [vmem:[#allocation2 + $0x78] sm:$0xff]
      %v602 = vld [vmem:[#allocation2 + $0x80] sm:$0xff]
      %v603 = vld [vmem:[#allocation2 + $0xa0] sm:$0xff]
      %v604 = vld [vmem:[#allocation2 + $0xa8] sm:$0xff]
      %v605 = vld [vmem:[#allocation2 + $0xb0] sm:$0xff]
      %618 = vrot.lane.b32.xlu0 %v594, 122
      %v619 = vpop.permute.xlu0 %618
      %620 = vrot.lane.b32.xlu0 %v595, 122
      %v621 = vpop.permute.xlu0 %620
      %622 = vrot.lane.b32.xlu0 %v596, 122
      %v623 = vpop.permute.xlu0 %622
      %624 = vrot.lane.b32.xlu0 %v597, 122
      %v625 = vpop.permute.xlu0 %624
      %626 = vrot.lane.b32.xlu0 %v598, 122
      %v627 = vpop.permute.xlu0 %626
      %628 = vrot.lane.b32.xlu0 %v599, 122
      %v629 = vpop.permute.xlu0 %628
      %630 = vrot.lane.b32.xlu0 %v600, 122
      %v631 = vpop.permute.xlu0 %630
      %632 = vrot.lane.b32.xlu0 %v601, 122
      %v633 = vpop.permute.xlu0 %632
      %634 = vrot.lane.b32.xlu0 %v602, 122
      %v635 = vpop.permute.xlu0 %634
      %636 = vrot.lane.b32.xlu0 %v603, 122
      %v637 = vpop.permute.xlu0 %636
      %638 = vrot.lane.b32.xlu0 %v604, 122
      %v639 = vpop.permute.xlu0 %638
      %640 = vrot.lane.b32.xlu0 %v605, 122
      %v641 = vpop.permute.xlu0 %640
      %vm642 = vcmask 998400
      %v643 = vsel %vm642, %v619, %v621
      %v644 = vsel %vm642, %v621, %v623
      %v645 = vsel %vm642, %v625, %v627
      %v646 = vsel %vm642, %v627, %v629
      %v647 = vsel %vm642, %v631, %v633
      %v648 = vsel %vm642, %v633, %v635
      %v649 = vsel %vm642, %v637, %v639
      %v650 = vsel %vm642, %v639, %v641
      %v659 = vsel %vm220, %v643, 0.0
      %v660 = vsel %vm221, %v644, 0.0
      %v661 = vsel %vm220, %v645, 0.0
      %v662 = vsel %vm221, %v646, 0.0
      %v663 = vsel %vm220, %v647, 0.0
      %v664 = vsel %vm221, %v648, 0.0
      %v665 = vsel %vm220, %v649, 0.0
      %v666 = vsel %vm221, %v650, 0.0
      %667 = vst [vmem:[#allocation3 + $0x140] sm:$0xff] %v659
      %668 = vst [vmem:[#allocation3 + $0x148] sm:$0xff] %v660
      %669 = vst [vmem:[#allocation3 + $0x150] sm:$0xff] %v661
      %670 = vst [vmem:[#allocation3 + $0x158] sm:$0xff] %v662
      %671 = vst [vmem:[#allocation3 + $0x160] sm:$0xff] %v663
      %672 = vst [vmem:[#allocation3 + $0x168] sm:$0xff] %v664
      %673 = vst [vmem:[#allocation3 + $0x170] sm:$0xff] %v665
      %674 = vst [vmem:[#allocation3 + $0x178] sm:$0xff] %v666
      %v675 = vld [vmem:[#allocation2 + $0x10] sm:$0xff]
      %v676 = vld [vmem:[#allocation2 + $0x18] sm:$0xff]
      %v677 = vld [vmem:[#allocation2 + $0x20] sm:$0xff]
      %v678 = vld [vmem:[#allocation2 + $0x40] sm:$0xff]
      %v679 = vld [vmem:[#allocation2 + $0x48] sm:$0xff]
      %v680 = vld [vmem:[#allocation2 + $0x50] sm:$0xff]
      %v681 = vld [vmem:[#allocation2 + $0x70] sm:$0xff]
      %v682 = vld [vmem:[#allocation2 + $0x78] sm:$0xff]
      %v683 = vld [vmem:[#allocation2 + $0x80] sm:$0xff]
      %v684 = vld [vmem:[#allocation2 + $0xa0] sm:$0xff]
      %v685 = vld [vmem:[#allocation2 + $0xa8] sm:$0xff]
      %v686 = vld [vmem:[#allocation2 + $0xb0] sm:$0xff]
      %699 = vrot.lane.b32.xlu0 %v675, 38
      %v700 = vpop.permute.xlu0 %699
      %701 = vrot.lane.b32.xlu0 %v676, 38
      %v702 = vpop.permute.xlu0 %701
      %703 = vrot.lane.b32.xlu0 %v677, 38
      %v704 = vpop.permute.xlu0 %703
      %705 = vrot.lane.b32.xlu0 %v678, 38
      %v706 = vpop.permute.xlu0 %705
      %707 = vrot.lane.b32.xlu0 %v679, 38
      %v708 = vpop.permute.xlu0 %707
      %709 = vrot.lane.b32.xlu0 %v680, 38
      %v710 = vpop.permute.xlu0 %709
      %711 = vrot.lane.b32.xlu0 %v681, 38
      %v712 = vpop.permute.xlu0 %711
      %713 = vrot.lane.b32.xlu0 %v682, 38
      %v714 = vpop.permute.xlu0 %713
      %715 = vrot.lane.b32.xlu0 %v683, 38
      %v716 = vpop.permute.xlu0 %715
      %717 = vrot.lane.b32.xlu0 %v684, 38
      %v718 = vpop.permute.xlu0 %717
      %719 = vrot.lane.b32.xlu0 %v685, 38
      %v720 = vpop.permute.xlu0 %719
      %721 = vrot.lane.b32.xlu0 %v686, 38
      %v722 = vpop.permute.xlu0 %721
      %vm723 = vcmask 310272
      %v724 = vsel %vm723, %v700, %v702
      %v725 = vsel %vm723, %v702, %v704
      %v726 = vsel %vm723, %v706, %v708
      %v727 = vsel %vm723, %v708, %v710
      %v728 = vsel %vm723, %v712, %v714
      %v729 = vsel %vm723, %v714, %v716
      %v730 = vsel %vm723, %v718, %v720
      %v731 = vsel %vm723, %v720, %v722
      %v740 = vsel %vm212, %v724, 0.0
      %v741 = vsel %vm213, %v725, 0.0
      %v742 = vsel %vm212, %v726, 0.0
      %v743 = vsel %vm213, %v727, 0.0
      %v744 = vsel %vm212, %v728, 0.0
      %v745 = vsel %vm213, %v729, 0.0
      %v746 = vsel %vm212, %v730, 0.0
      %v747 = vsel %vm213, %v731, 0.0
      %748 = vst [vmem:[#allocation3 + $0x180] sm:$0xff] %v740
      %749 = vst [vmem:[#allocation3 + $0x188] sm:$0xff] %v741
      %750 = vst [vmem:[#allocation3 + $0x190] sm:$0xff] %v742
      %751 = vst [vmem:[#allocation3 + $0x198] sm:$0xff] %v743
      %752 = vst [vmem:[#allocation3 + $0x1a0] sm:$0xff] %v744
      %753 = vst [vmem:[#allocation3 + $0x1a8] sm:$0xff] %v745
      %754 = vst [vmem:[#allocation3 + $0x1b0] sm:$0xff] %v746
      %755 = vst [vmem:[#allocation3 + $0x1b8] sm:$0xff] %v747
      %v756 = vld [vmem:[#allocation2 + $0x10] sm:$0xff]
      %v757 = vld [vmem:[#allocation2 + $0x18] sm:$0xff]
      %v758 = vld [vmem:[#allocation2 + $0x20] sm:$0xff]
      %v759 = vld [vmem:[#allocation2 + $0x40] sm:$0xff]
      %v760 = vld [vmem:[#allocation2 + $0x48] sm:$0xff]
      %v761 = vld [vmem:[#allocation2 + $0x50] sm:$0xff]
      %v762 = vld [vmem:[#allocation2 + $0x70] sm:$0xff]
      %v763 = vld [vmem:[#allocation2 + $0x78] sm:$0xff]
      %v764 = vld [vmem:[#allocation2 + $0x80] sm:$0xff]
      %v765 = vld [vmem:[#allocation2 + $0xa0] sm:$0xff]
      %v766 = vld [vmem:[#allocation2 + $0xa8] sm:$0xff]
      %v767 = vld [vmem:[#allocation2 + $0xb0] sm:$0xff]
      %780 = vrot.lane.b32.xlu0 %v756, 32
      %v781 = vpop.permute.xlu0 %780
      %782 = vrot.lane.b32.xlu0 %v757, 32
      %v783 = vpop.permute.xlu0 %782
      %784 = vrot.lane.b32.xlu0 %v758, 32
      %v785 = vpop.permute.xlu0 %784
      %786 = vrot.lane.b32.xlu0 %v759, 32
      %v787 = vpop.permute.xlu0 %786
      %788 = vrot.lane.b32.xlu0 %v760, 32
      %v789 = vpop.permute.xlu0 %788
      %790 = vrot.lane.b32.xlu0 %v761, 32
      %v791 = vpop.permute.xlu0 %790
      %792 = vrot.lane.b32.xlu0 %v762, 32
      %v793 = vpop.permute.xlu0 %792
      %794 = vrot.lane.b32.xlu0 %v763, 32
      %v795 = vpop.permute.xlu0 %794
      %796 = vrot.lane.b32.xlu0 %v764, 32
      %v797 = vpop.permute.xlu0 %796
      %798 = vrot.lane.b32.xlu0 %v765, 32
      %v799 = vpop.permute.xlu0 %798
      %800 = vrot.lane.b32.xlu0 %v766, 32
      %v801 = vpop.permute.xlu0 %800
      %802 = vrot.lane.b32.xlu0 %v767, 32
      %v803 = vpop.permute.xlu0 %802
      %vm804 = vcmask 261120
      %v805 = vsel %vm804, %v781, %v783
      %v806 = vsel %vm804, %v783, %v785
      %v807 = vsel %vm804, %v787, %v789
      %v808 = vsel %vm804, %v789, %v791
      %v809 = vsel %vm804, %v793, %v795
      %v810 = vsel %vm804, %v795, %v797
      %v811 = vsel %vm804, %v799, %v801
      %v812 = vsel %vm804, %v801, %v803
      %821 = vst [vmem:[#allocation3 + $0x1c0] sm:$0xff] %v805
      %822 = vst [vmem:[#allocation3 + $0x1c8] sm:$0xff] %v806
      %823 = vst [vmem:[#allocation3 + $0x1d0] sm:$0xff] %v807
      %824 = vst [vmem:[#allocation3 + $0x1d8] sm:$0xff] %v808
      %825 = vst [vmem:[#allocation3 + $0x1e0] sm:$0xff] %v809
      %826 = vst [vmem:[#allocation3 + $0x1e8] sm:$0xff] %v810
      %827 = vst [vmem:[#allocation3 + $0x1f0] sm:$0xff] %v811
      %828 = vst [vmem:[#allocation3 + $0x1f8] sm:$0xff] %v812
      %v829 = vld [vmem:[#allocation2 + $0x10] sm:$0xff]
      %v830 = vld [vmem:[#allocation2 + $0x18] sm:$0xff]
      %v831 = vld [vmem:[#allocation2 + $0x20] sm:$0xff]
      %v832 = vld [vmem:[#allocation2 + $0x40] sm:$0xff]
      %v833 = vld [vmem:[#allocation2 + $0x48] sm:$0xff]
      %v834 = vld [vmem:[#allocation2 + $0x50] sm:$0xff]
      %v835 = vld [vmem:[#allocation2 + $0x70] sm:$0xff]
      %v836 = vld [vmem:[#allocation2 + $0x78] sm:$0xff]
      %v837 = vld [vmem:[#allocation2 + $0x80] sm:$0xff]
      %v838 = vld [vmem:[#allocation2 + $0xa0] sm:$0xff]
      %v839 = vld [vmem:[#allocation2 + $0xa8] sm:$0xff]
      %v840 = vld [vmem:[#allocation2 + $0xb0] sm:$0xff]
      %853 = vrot.lane.b32.xlu0 %v829, 26
      %v854 = vpop.permute.xlu0 %853
      %855 = vrot.lane.b32.xlu0 %v830, 26
      %v856 = vpop.permute.xlu0 %855
      %857 = vrot.lane.b32.xlu0 %v831, 26
      %v858 = vpop.permute.xlu0 %857
      %859 = vrot.lane.b32.xlu0 %v832, 26
      %v860 = vpop.permute.xlu0 %859
      %861 = vrot.lane.b32.xlu0 %v833, 26
      %v862 = vpop.permute.xlu0 %861
      %863 = vrot.lane.b32.xlu0 %v834, 26
      %v864 = vpop.permute.xlu0 %863
      %865 = vrot.lane.b32.xlu0 %v835, 26
      %v866 = vpop.permute.xlu0 %865
      %867 = vrot.lane.b32.xlu0 %v836, 26
      %v868 = vpop.permute.xlu0 %867
      %869 = vrot.lane.b32.xlu0 %v837, 26
      %v870 = vpop.permute.xlu0 %869
      %871 = vrot.lane.b32.xlu0 %v838, 26
      %v872 = vpop.permute.xlu0 %871
      %873 = vrot.lane.b32.xlu0 %v839, 26
      %v874 = vpop.permute.xlu0 %873
      %875 = vrot.lane.b32.xlu0 %v840, 26
      %v876 = vpop.permute.xlu0 %875
      %vm877 = vcmask 211968
      %v878 = vsel %vm877, %v854, %v856
      %v879 = vsel %vm877, %v856, %v858
      %v880 = vsel %vm877, %v860, %v862
      %v881 = vsel %vm877, %v862, %v864
      %v882 = vsel %vm877, %v866, %v868
      %v883 = vsel %vm877, %v868, %v870
      %v884 = vsel %vm877, %v872, %v874
      %v885 = vsel %vm877, %v874, %v876
      %v894 = vsel %vm220, %v878, 0.0
      %v895 = vsel %vm221, %v879, 0.0
      %v896 = vsel %vm220, %v880, 0.0
      %v897 = vsel %vm221, %v881, 0.0
      %v898 = vsel %vm220, %v882, 0.0
      %v899 = vsel %vm221, %v883, 0.0
      %v900 = vsel %vm220, %v884, 0.0
      %v901 = vsel %vm221, %v885, 0.0
      %902 = vst [vmem:[#allocation3 + $0x200] sm:$0xff] %v894
      %903 = vst [vmem:[#allocation3 + $0x208] sm:$0xff] %v895
      %904 = vst [vmem:[#allocation3 + $0x210] sm:$0xff] %v896
      %905 = vst [vmem:[#allocation3 + $0x218] sm:$0xff] %v897
      %906 = vst [vmem:[#allocation3 + $0x220] sm:$0xff] %v898
      %907 = vst [vmem:[#allocation3 + $0x228] sm:$0xff] %v899
      %908 = vst [vmem:[#allocation3 + $0x230] sm:$0xff] %v900
      %909 = vst [vmem:[#allocation3 + $0x238] sm:$0xff] %v901
      %v910 = vld [vmem:[#allocation2] sm:$0xff]
      %v911 = vld [vmem:[#allocation2 + $0x8] sm:$0xff]
      %v912 = vld [vmem:[#allocation2 + $0x10] sm:$0xff]
      %v913 = vld [vmem:[#allocation2 + $0x30] sm:$0xff]
      %v914 = vld [vmem:[#allocation2 + $0x38] sm:$0xff]
      %v915 = vld [vmem:[#allocation2 + $0x40] sm:$0xff]
      %v916 = vld [vmem:[#allocation2 + $0x60] sm:$0xff]
      %v917 = vld [vmem:[#allocation2 + $0x68] sm:$0xff]
      %v918 = vld [vmem:[#allocation2 + $0x70] sm:$0xff]
      %v919 = vld [vmem:[#allocation2 + $0x90] sm:$0xff]
      %v920 = vld [vmem:[#allocation2 + $0x98] sm:$0xff]
      %v921 = vld [vmem:[#allocation2 + $0xa0] sm:$0xff]
      %934 = vrot.lane.b32.xlu0 %v910, 76
      %v935 = vpop.permute.xlu0 %934
      %936 = vrot.lane.b32.xlu0 %v911, 76
      %v937 = vpop.permute.xlu0 %936
      %938 = vrot.lane.b32.xlu0 %v912, 76
      %v939 = vpop.permute.xlu0 %938
      %940 = vrot.lane.b32.xlu0 %v913, 76
      %v941 = vpop.permute.xlu0 %940
      %942 = vrot.lane.b32.xlu0 %v914, 76
      %v943 = vpop.permute.xlu0 %942
      %944 = vrot.lane.b32.xlu0 %v915, 76
      %v945 = vpop.permute.xlu0 %944
      %946 = vrot.lane.b32.xlu0 %v916, 76
      %v947 = vpop.permute.xlu0 %946
      %948 = vrot.lane.b32.xlu0 %v917, 76
      %v949 = vpop.permute.xlu0 %948
      %950 = vrot.lane.b32.xlu0 %v918, 76
      %v951 = vpop.permute.xlu0 %950
      %952 = vrot.lane.b32.xlu0 %v919, 76
      %v953 = vpop.permute.xlu0 %952
      %954 = vrot.lane.b32.xlu0 %v920, 76
      %v955 = vpop.permute.xlu0 %954
      %956 = vrot.lane.b32.xlu0 %v921, 76
      %v957 = vpop.permute.xlu0 %956
      %vm958 = vcmask 621568
      %v959 = vsel %vm958, %v935, %v937
      %v960 = vsel %vm958, %v937, %v939
      %v961 = vsel %vm958, %v941, %v943
      %v962 = vsel %vm958, %v943, %v945
      %v963 = vsel %vm958, %v947, %v949
      %v964 = vsel %vm958, %v949, %v951
      %v965 = vsel %vm958, %v953, %v955
      %v966 = vsel %vm958, %v955, %v957
      %v975 = vsel %vm204, %v959, 0.0
      %v976 = vsel %vm205, %v960, 0.0
      %v977 = vsel %vm204, %v961, 0.0
      %v978 = vsel %vm205, %v962, 0.0
      %v979 = vsel %vm204, %v963, 0.0
      %v980 = vsel %vm205, %v964, 0.0
      %v981 = vsel %vm204, %v965, 0.0
      %v982 = vsel %vm205, %v966, 0.0
      %983 = vst [vmem:[#allocation3 + $0x240] sm:$0xff] %v975
      %984 = vst [vmem:[#allocation3 + $0x248] sm:$0xff] %v976
      %985 = vst [vmem:[#allocation3 + $0x250] sm:$0xff] %v977
      %986 = vst [vmem:[#allocation3 + $0x258] sm:$0xff] %v978
      %987 = vst [vmem:[#allocation3 + $0x260] sm:$0xff] %v979
      %988 = vst [vmem:[#allocation3 + $0x268] sm:$0xff] %v980
      %989 = vst [vmem:[#allocation3 + $0x270] sm:$0xff] %v981
      %990 = vst [vmem:[#allocation3 + $0x278] sm:$0xff] %v982
      %v991 = vld [vmem:[#allocation2] sm:$0xff]
      %v992 = vld [vmem:[#allocation2 + $0x8] sm:$0xff]
      %v993 = vld [vmem:[#allocation2 + $0x10] sm:$0xff]
      %v994 = vld [vmem:[#allocation2 + $0x30] sm:$0xff]
      %v995 = vld [vmem:[#allocation2 + $0x38] sm:$0xff]
      %v996 = vld [vmem:[#allocation2 + $0x40] sm:$0xff]
      %v997 = vld [vmem:[#allocation2 + $0x60] sm:$0xff]
      %v998 = vld [vmem:[#allocation2 + $0x68] sm:$0xff]
      %v999 = vld [vmem:[#allocation2 + $0x70] sm:$0xff]
      %v1000 = vld [vmem:[#allocation2 + $0x90] sm:$0xff]
      %v1001 = vld [vmem:[#allocation2 + $0x98] sm:$0xff]
      %v1002 = vld [vmem:[#allocation2 + $0xa0] sm:$0xff]
      %1015 = vrot.lane.b32.xlu0 %v991, 64
      %v1016 = vpop.permute.xlu0 %1015
      %1017 = vrot.lane.b32.xlu0 %v992, 64
      %v1018 = vpop.permute.xlu0 %1017
      %1019 = vrot.lane.b32.xlu0 %v993, 64
      %v1020 = vpop.permute.xlu0 %1019
      %1021 = vrot.lane.b32.xlu0 %v994, 64
      %v1022 = vpop.permute.xlu0 %1021
      %1023 = vrot.lane.b32.xlu0 %v995, 64
      %v1024 = vpop.permute.xlu0 %1023
      %1025 = vrot.lane.b32.xlu0 %v996, 64
      %v1026 = vpop.permute.xlu0 %1025
      %1027 = vrot.lane.b32.xlu0 %v997, 64
      %v1028 = vpop.permute.xlu0 %1027
      %1029 = vrot.lane.b32.xlu0 %v998, 64
      %v1030 = vpop.permute.xlu0 %1029
      %1031 = vrot.lane.b32.xlu0 %v999, 64
      %v1032 = vpop.permute.xlu0 %1031
      %1033 = vrot.lane.b32.xlu0 %v1000, 64
      %v1034 = vpop.permute.xlu0 %1033
      %1035 = vrot.lane.b32.xlu0 %v1001, 64
      %v1036 = vpop.permute.xlu0 %1035
      %1037 = vrot.lane.b32.xlu0 %v1002, 64
      %v1038 = vpop.permute.xlu0 %1037
      %vm1039 = vcmask 523264
      %v1040 = vsel %vm1039, %v1016, %v1018
      %v1041 = vsel %vm1039, %v1018, %v1020
      %v1042 = vsel %vm1039, %v1022, %v1024
      %v1043 = vsel %vm1039, %v1024, %v1026
      %v1044 = vsel %vm1039, %v1028, %v1030
      %v1045 = vsel %vm1039, %v1030, %v1032
      %v1046 = vsel %vm1039, %v1034, %v1036
      %v1047 = vsel %vm1039, %v1036, %v1038
      %1056 = vst [vmem:[#allocation3 + $0x280] sm:$0xff] %v1040
      %1057 = vst [vmem:[#allocation3 + $0x288] sm:$0xff] %v1041
      %1058 = vst [vmem:[#allocation3 + $0x290] sm:$0xff] %v1042
      %1059 = vst [vmem:[#allocation3 + $0x298] sm:$0xff] %v1043
      %1060 = vst [vmem:[#allocation3 + $0x2a0] sm:$0xff] %v1044
      %1061 = vst [vmem:[#allocation3 + $0x2a8] sm:$0xff] %v1045
      %1062 = vst [vmem:[#allocation3 + $0x2b0] sm:$0xff] %v1046
      %1063 = vst [vmem:[#allocation3 + $0x2b8] sm:$0xff] %v1047
      %v1064 = vld [vmem:[#allocation2] sm:$0xff]
      %v1065 = vld [vmem:[#allocation2 + $0x8] sm:$0xff]
      %v1066 = vld [vmem:[#allocation2 + $0x10] sm:$0xff]
      %v1067 = vld [vmem:[#allocation2 + $0x30] sm:$0xff]
      %v1068 = vld [vmem:[#allocation2 + $0x38] sm:$0xff]
      %v1069 = vld [vmem:[#allocation2 + $0x40] sm:$0xff]
      %v1070 = vld [vmem:[#allocation2 + $0x60] sm:$0xff]
      %v1071 = vld [vmem:[#allocation2 + $0x68] sm:$0xff]
      %v1072 = vld [vmem:[#allocation2 + $0x70] sm:$0xff]
      %v1073 = vld [vmem:[#allocation2 + $0x90] sm:$0xff]
      %v1074 = vld [vmem:[#allocation2 + $0x98] sm:$0xff]
      %v1075 = vld [vmem:[#allocation2 + $0xa0] sm:$0xff]
      %1088 = vrot.lane.b32.xlu0 %v1064, 52
      %v1089 = vpop.permute.xlu0 %1088
      %1090 = vrot.lane.b32.xlu0 %v1065, 52
      %v1091 = vpop.permute.xlu0 %1090
      %1092 = vrot.lane.b32.xlu0 %v1066, 52
      %v1093 = vpop.permute.xlu0 %1092
      %1094 = vrot.lane.b32.xlu0 %v1067, 52
      %v1095 = vpop.permute.xlu0 %1094
      %1096 = vrot.lane.b32.xlu0 %v1068, 52
      %v1097 = vpop.permute.xlu0 %1096
      %1098 = vrot.lane.b32.xlu0 %v1069, 52
      %v1099 = vpop.permute.xlu0 %1098
      %1100 = vrot.lane.b32.xlu0 %v1070, 52
      %v1101 = vpop.permute.xlu0 %1100
      %1102 = vrot.lane.b32.xlu0 %v1071, 52
      %v1103 = vpop.permute.xlu0 %1102
      %1104 = vrot.lane.b32.xlu0 %v1072, 52
      %v1105 = vpop.permute.xlu0 %1104
      %1106 = vrot.lane.b32.xlu0 %v1073, 52
      %v1107 = vpop.permute.xlu0 %1106
      %1108 = vrot.lane.b32.xlu0 %v1074, 52
      %v1109 = vpop.permute.xlu0 %1108
      %1110 = vrot.lane.b32.xlu0 %v1075, 52
      %v1111 = vpop.permute.xlu0 %1110
      %vm1112 = vcmask 424960
      %v1113 = vsel %vm1112, %v1089, %v1091
      %v1114 = vsel %vm1112, %v1091, %v1093
      %v1115 = vsel %vm1112, %v1095, %v1097
      %v1116 = vsel %vm1112, %v1097, %v1099
      %v1117 = vsel %vm1112, %v1101, %v1103
      %v1118 = vsel %vm1112, %v1103, %v1105
      %v1119 = vsel %vm1112, %v1107, %v1109
      %v1120 = vsel %vm1112, %v1109, %v1111
      %v1129 = vsel %vm228, %v1113, 0.0
      %v1130 = vsel %vm229, %v1114, 0.0
      %v1131 = vsel %vm228, %v1115, 0.0
      %v1132 = vsel %vm229, %v1116, 0.0
      %v1133 = vsel %vm228, %v1117, 0.0
      %v1134 = vsel %vm229, %v1118, 0.0
      %v1135 = vsel %vm228, %v1119, 0.0
      %v1136 = vsel %vm229, %v1120, 0.0
      %1137 = vst [vmem:[#allocation3 + $0x2c0] sm:$0xff] %v1129
      %1138 = vst [vmem:[#allocation3 + $0x2c8] sm:$0xff] %v1130
      %1139 = vst [vmem:[#allocation3 + $0x2d0] sm:$0xff] %v1131
      %1140 = vst [vmem:[#allocation3 + $0x2d8] sm:$0xff] %v1132
      %1141 = vst [vmem:[#allocation3 + $0x2e0] sm:$0xff] %v1133
      %1142 = vst [vmem:[#allocation3 + $0x2e8] sm:$0xff] %v1134
      %1143 = vst [vmem:[#allocation3 + $0x2f0] sm:$0xff] %v1135
      %1144 = vst [vmem:[#allocation3 + $0x2f8] sm:$0xff] %v1136
      %v1145 = vld [vmem:[#allocation2 + $0x8] sm:$0xff]
      %v1146 = vld [vmem:[#allocation2 + $0x10] sm:$0xff]
      %v1147 = vld [vmem:[#allocation2 + $0x18] sm:$0xff]
      %v1148 = vld [vmem:[#allocation2 + $0x38] sm:$0xff]
      %v1149 = vld [vmem:[#allocation2 + $0x40] sm:$0xff]
      %v1150 = vld [vmem:[#allocation2 + $0x48] sm:$0xff]
      %v1151 = vld [vmem:[#allocation2 + $0x68] sm:$0xff]
      %v1152 = vld [vmem:[#allocation2 + $0x70] sm:$0xff]
      %v1153 = vld [vmem:[#allocation2 + $0x78] sm:$0xff]
      %v1154 = vld [vmem:[#allocation2 + $0x98] sm:$0xff]
      %v1155 = vld [vmem:[#allocation2 + $0xa0] sm:$0xff]
      %v1156 = vld [vmem:[#allocation2 + $0xa8] sm:$0xff]
      %1169 = vrot.lane.b32.xlu0 %v1145, 12
      %v1170 = vpop.permute.xlu0 %1169
      %1171 = vrot.lane.b32.xlu0 %v1146, 12
      %v1172 = vpop.permute.xlu0 %1171
      %1173 = vrot.lane.b32.xlu0 %v1147, 12
      %v1174 = vpop.permute.xlu0 %1173
      %1175 = vrot.lane.b32.xlu0 %v1148, 12
      %v1176 = vpop.permute.xlu0 %1175
      %1177 = vrot.lane.b32.xlu0 %v1149, 12
      %v1178 = vpop.permute.xlu0 %1177
      %1179 = vrot.lane.b32.xlu0 %v1150, 12
      %v1180 = vpop.permute.xlu0 %1179
      %1181 = vrot.lane.b32.xlu0 %v1151, 12
      %v1182 = vpop.permute.xlu0 %1181
      %1183 = vrot.lane.b32.xlu0 %v1152, 12
      %v1184 = vpop.permute.xlu0 %1183
      %1185 = vrot.lane.b32.xlu0 %v1153, 12
      %v1186 = vpop.permute.xlu0 %1185
      %1187 = vrot.lane.b32.xlu0 %v1154, 12
      %v1188 = vpop.permute.xlu0 %1187
      %1189 = vrot.lane.b32.xlu0 %v1155, 12
      %v1190 = vpop.permute.xlu0 %1189
      %1191 = vrot.lane.b32.xlu0 %v1156, 12
      %v1192 = vpop.permute.xlu0 %1191
      %vm1193 = vcmask 97280
      %v1194 = vsel %vm1193, %v1170, %v1172
      %v1195 = vsel %vm1193, %v1172, %v1174
      %v1196 = vsel %vm1193, %v1176, %v1178
      %v1197 = vsel %vm1193, %v1178, %v1180
      %v1198 = vsel %vm1193, %v1182, %v1184
      %v1199 = vsel %vm1193, %v1184, %v1186
      %v1200 = vsel %vm1193, %v1188, %v1190
      %v1201 = vsel %vm1193, %v1190, %v1192
      %v1210 = vsel %vm204, %v1194, 0.0
      %v1211 = vsel %vm205, %v1195, 0.0
      %v1212 = vsel %vm204, %v1196, 0.0
      %v1213 = vsel %vm205, %v1197, 0.0
      %v1214 = vsel %vm204, %v1198, 0.0
      %v1215 = vsel %vm205, %v1199, 0.0
      %v1216 = vsel %vm204, %v1200, 0.0
      %v1217 = vsel %vm205, %v1201, 0.0
      %1218 = vst [vmem:[#allocation3 + $0x300] sm:$0xff] %v1210
      %1219 = vst [vmem:[#allocation3 + $0x308] sm:$0xff] %v1211
      %1220 = vst [vmem:[#allocation3 + $0x310] sm:$0xff] %v1212
      %1221 = vst [vmem:[#allocation3 + $0x318] sm:$0xff] %v1213
      %1222 = vst [vmem:[#allocation3 + $0x320] sm:$0xff] %v1214
      %1223 = vst [vmem:[#allocation3 + $0x328] sm:$0xff] %v1215
      %1224 = vst [vmem:[#allocation3 + $0x330] sm:$0xff] %v1216
      %1225 = vst [vmem:[#allocation3 + $0x338] sm:$0xff] %v1217
      %v1226 = vld [vmem:[#allocation2 + $0x10] sm:$0xff]
      %v1227 = vld [vmem:[#allocation2 + $0x18] sm:$0xff]
      %v1228 = vld [vmem:[#allocation2 + $0x20] sm:$0xff]
      %v1229 = vld [vmem:[#allocation2 + $0x40] sm:$0xff]
      %v1230 = vld [vmem:[#allocation2 + $0x48] sm:$0xff]
      %v1231 = vld [vmem:[#allocation2 + $0x50] sm:$0xff]
      %v1232 = vld [vmem:[#allocation2 + $0x70] sm:$0xff]
      %v1233 = vld [vmem:[#allocation2 + $0x78] sm:$0xff]
      %v1234 = vld [vmem:[#allocation2 + $0x80] sm:$0xff]
      %v1235 = vld [vmem:[#allocation2 + $0xa0] sm:$0xff]
      %v1236 = vld [vmem:[#allocation2 + $0xa8] sm:$0xff]
      %v1237 = vld [vmem:[#allocation2 + $0xb0] sm:$0xff]
      %1250 = vrot.lane.b32.xlu0 %v1226, 116
      %v1251 = vpop.permute.xlu0 %1250
      %1252 = vrot.lane.b32.xlu0 %v1227, 116
      %v1253 = vpop.permute.xlu0 %1252
      %1254 = vrot.lane.b32.xlu0 %v1228, 116
      %v1255 = vpop.permute.xlu0 %1254
      %1256 = vrot.lane.b32.xlu0 %v1229, 116
      %v1257 = vpop.permute.xlu0 %1256
      %1258 = vrot.lane.b32.xlu0 %v1230, 116
      %v1259 = vpop.permute.xlu0 %1258
      %1260 = vrot.lane.b32.xlu0 %v1231, 116
      %v1261 = vpop.permute.xlu0 %1260
      %1262 = vrot.lane.b32.xlu0 %v1232, 116
      %v1263 = vpop.permute.xlu0 %1262
      %1264 = vrot.lane.b32.xlu0 %v1233, 116
      %v1265 = vpop.permute.xlu0 %1264
      %1266 = vrot.lane.b32.xlu0 %v1234, 116
      %v1267 = vpop.permute.xlu0 %1266
      %1268 = vrot.lane.b32.xlu0 %v1235, 116
      %v1269 = vpop.permute.xlu0 %1268
      %1270 = vrot.lane.b32.xlu0 %v1236, 116
      %v1271 = vpop.permute.xlu0 %1270
      %1272 = vrot.lane.b32.xlu0 %v1237, 116
      %v1273 = vpop.permute.xlu0 %1272
      %vm1274 = vcmask 949248
      %v1275 = vsel %vm1274, %v1251, %v1253
      %v1276 = vsel %vm1274, %v1253, %v1255
      %v1277 = vsel %vm1274, %v1257, %v1259
      %v1278 = vsel %vm1274, %v1259, %v1261
      %v1279 = vsel %vm1274, %v1263, %v1265
      %v1280 = vsel %vm1274, %v1265, %v1267
      %v1281 = vsel %vm1274, %v1269, %v1271
      %v1282 = vsel %vm1274, %v1271, %v1273
      %v1291 = vsel %vm228, %v1275, 0.0
      %v1292 = vsel %vm229, %v1276, 0.0
      %v1293 = vsel %vm228, %v1277, 0.0
      %v1294 = vsel %vm229, %v1278, 0.0
      %v1295 = vsel %vm228, %v1279, 0.0
      %v1296 = vsel %vm229, %v1280, 0.0
      %v1297 = vsel %vm228, %v1281, 0.0
      %v1298 = vsel %vm229, %v1282, 0.0
      %1299 = vst [vmem:[#allocation3 + $0x340] sm:$0xff] %v1291
      %1300 = vst [vmem:[#allocation3 + $0x348] sm:$0xff] %v1292
      %1301 = vst [vmem:[#allocation3 + $0x350] sm:$0xff] %v1293
      %1302 = vst [vmem:[#allocation3 + $0x358] sm:$0xff] %v1294
      %1303 = vst [vmem:[#allocation3 + $0x360] sm:$0xff] %v1295
      %1304 = vst [vmem:[#allocation3 + $0x368] sm:$0xff] %v1296
      %1305 = vst [vmem:[#allocation3 + $0x370] sm:$0xff] %v1297
      %1306 = vst [vmem:[#allocation3 + $0x378] sm:$0xff] %v1298
      %v1307 = vld [vmem:[#allocation2 + $0x18] sm:$0xff]
      %v1308 = vld [vmem:[#allocation2 + $0x20] sm:$0xff]
      %v1309 = vld [vmem:[#allocation2 + $0x28] sm:$0xff]
      %v1310 = vld [vmem:[#allocation2 + $0x48] sm:$0xff]
      %v1311 = vld [vmem:[#allocation2 + $0x50] sm:$0xff]
      %v1312 = vld [vmem:[#allocation2 + $0x58] sm:$0xff]
      %v1313 = vld [vmem:[#allocation2 + $0x78] sm:$0xff]
      %v1314 = vld [vmem:[#allocation2 + $0x80] sm:$0xff]
      %v1315 = vld [vmem:[#allocation2 + $0x88] sm:$0xff]
      %v1316 = vld [vmem:[#allocation2 + $0xa8] sm:$0xff]
      %v1317 = vld [vmem:[#allocation2 + $0xb0] sm:$0xff]
      %v1318 = vld [vmem:[#allocation2 + $0xb8] sm:$0xff]
      %1331 = vrot.lane.b32.xlu0 %v1307, 76
      %v1332 = vpop.permute.xlu0 %1331
      %1333 = vrot.lane.b32.xlu0 %v1308, 76
      %v1334 = vpop.permute.xlu0 %1333
      %1335 = vrot.lane.b32.xlu0 %v1309, 76
      %v1336 = vpop.permute.xlu0 %1335
      %1337 = vrot.lane.b32.xlu0 %v1310, 76
      %v1338 = vpop.permute.xlu0 %1337
      %1339 = vrot.lane.b32.xlu0 %v1311, 76
      %v1340 = vpop.permute.xlu0 %1339
      %1341 = vrot.lane.b32.xlu0 %v1312, 76
      %v1342 = vpop.permute.xlu0 %1341
      %1343 = vrot.lane.b32.xlu0 %v1313, 76
      %v1344 = vpop.permute.xlu0 %1343
      %1345 = vrot.lane.b32.xlu0 %v1314, 76
      %v1346 = vpop.permute.xlu0 %1345
      %1347 = vrot.lane.b32.xlu0 %v1315, 76
      %v1348 = vpop.permute.xlu0 %1347
      %1349 = vrot.lane.b32.xlu0 %v1316, 76
      %v1350 = vpop.permute.xlu0 %1349
      %1351 = vrot.lane.b32.xlu0 %v1317, 76
      %v1352 = vpop.permute.xlu0 %1351
      %1353 = vrot.lane.b32.xlu0 %v1318, 76
      %v1354 = vpop.permute.xlu0 %1353
      %v1355 = vsel %vm958, %v1332, %v1334
      %v1356 = vsel %vm958, %v1334, %v1336
      %v1357 = vsel %vm958, %v1338, %v1340
      %v1358 = vsel %vm958, %v1340, %v1342
      %v1359 = vsel %vm958, %v1344, %v1346
      %v1360 = vsel %vm958, %v1346, %v1348
      %v1361 = vsel %vm958, %v1350, %v1352
      %v1362 = vsel %vm958, %v1352, %v1354
      %v1371 = vsel %vm204, %v1355, 0.0
      %v1372 = vsel %vm205, %v1356, 0.0
      %v1373 = vsel %vm204, %v1357, 0.0
      %v1374 = vsel %vm205, %v1358, 0.0
      %v1375 = vsel %vm204, %v1359, 0.0
      %v1376 = vsel %vm205, %v1360, 0.0
      %v1377 = vsel %vm204, %v1361, 0.0
      %v1378 = vsel %vm205, %v1362, 0.0
      %1379 = vst [vmem:[#allocation3 + $0x380] sm:$0xff] %v1371
      %1380 = vst [vmem:[#allocation3 + $0x388] sm:$0xff] %v1372
      %1381 = vst [vmem:[#allocation3 + $0x390] sm:$0xff] %v1373
      %1382 = vst [vmem:[#allocation3 + $0x398] sm:$0xff] %v1374
      %1383 = vst [vmem:[#allocation3 + $0x3a0] sm:$0xff] %v1375
      %1384 = vst [vmem:[#allocation3 + $0x3a8] sm:$0xff] %v1376
      %1385 = vst [vmem:[#allocation3 + $0x3b0] sm:$0xff] %v1377
      %1386 = vst [vmem:[#allocation3 + $0x3b8] sm:$0xff] %v1378
      %v1387 = vld [vmem:[#allocation2 + $0x18] sm:$0xff]
      %v1388 = vld [vmem:[#allocation2 + $0x20] sm:$0xff]
      %v1389 = vld [vmem:[#allocation2 + $0x28] sm:$0xff]
      %v1390 = vld [vmem:[#allocation2 + $0x48] sm:$0xff]
      %v1391 = vld [vmem:[#allocation2 + $0x50] sm:$0xff]
      %v1392 = vld [vmem:[#allocation2 + $0x58] sm:$0xff]
      %v1393 = vld [vmem:[#allocation2 + $0x78] sm:$0xff]
      %v1394 = vld [vmem:[#allocation2 + $0x80] sm:$0xff]
      %v1395 = vld [vmem:[#allocation2 + $0x88] sm:$0xff]
      %v1396 = vld [vmem:[#allocation2 + $0xa8] sm:$0xff]
      %v1397 = vld [vmem:[#allocation2 + $0xb0] sm:$0xff]
      %v1398 = vld [vmem:[#allocation2 + $0xb8] sm:$0xff]
      %1411 = vrot.lane.b32.xlu0 %v1387, 64
      %v1412 = vpop.permute.xlu0 %1411
      %1413 = vrot.lane.b32.xlu0 %v1388, 64
      %v1414 = vpop.permute.xlu0 %1413
      %1415 = vrot.lane.b32.xlu0 %v1389, 64
      %v1416 = vpop.permute.xlu0 %1415
      %1417 = vrot.lane.b32.xlu0 %v1390, 64
      %v1418 = vpop.permute.xlu0 %1417
      %1419 = vrot.lane.b32.xlu0 %v1391, 64
      %v1420 = vpop.permute.xlu0 %1419
      %1421 = vrot.lane.b32.xlu0 %v1392, 64
      %v1422 = vpop.permute.xlu0 %1421
      %1423 = vrot.lane.b32.xlu0 %v1393, 64
      %v1424 = vpop.permute.xlu0 %1423
      %1425 = vrot.lane.b32.xlu0 %v1394, 64
      %v1426 = vpop.permute.xlu0 %1425
      %1427 = vrot.lane.b32.xlu0 %v1395, 64
      %v1428 = vpop.permute.xlu0 %1427
      %1429 = vrot.lane.b32.xlu0 %v1396, 64
      %v1430 = vpop.permute.xlu0 %1429
      %1431 = vrot.lane.b32.xlu0 %v1397, 64
      %v1432 = vpop.permute.xlu0 %1431
      %1433 = vrot.lane.b32.xlu0 %v1398, 64
      %v1434 = vpop.permute.xlu0 %1433
      %v1435 = vsel %vm1039, %v1412, %v1414
      %v1436 = vsel %vm1039, %v1414, %v1416
      %v1437 = vsel %vm1039, %v1418, %v1420
      %v1438 = vsel %vm1039, %v1420, %v1422
      %v1439 = vsel %vm1039, %v1424, %v1426
      %v1440 = vsel %vm1039, %v1426, %v1428
      %v1441 = vsel %vm1039, %v1430, %v1432
      %v1442 = vsel %vm1039, %v1432, %v1434
      %1451 = vst [vmem:[#allocation3 + $0x3c0] sm:$0xff] %v1435
      %1452 = vst [vmem:[#allocation3 + $0x3c8] sm:$0xff] %v1436
      %1453 = vst [vmem:[#allocation3 + $0x3d0] sm:$0xff] %v1437
      %1454 = vst [vmem:[#allocation3 + $0x3d8] sm:$0xff] %v1438
      %1455 = vst [vmem:[#allocation3 + $0x3e0] sm:$0xff] %v1439
      %1456 = vst [vmem:[#allocation3 + $0x3e8] sm:$0xff] %v1440
      %1457 = vst [vmem:[#allocation3 + $0x3f0] sm:$0xff] %v1441
      %1458 = vst [vmem:[#allocation3 + $0x3f8] sm:$0xff] %v1442
      %v1459 = vld [vmem:[#allocation2 + $0x18] sm:$0xff]
      %v1460 = vld [vmem:[#allocation2 + $0x20] sm:$0xff]
      %v1461 = vld [vmem:[#allocation2 + $0x28] sm:$0xff]
      %v1462 = vld [vmem:[#allocation2 + $0x48] sm:$0xff]
      %v1463 = vld [vmem:[#allocation2 + $0x50] sm:$0xff]
      %v1464 = vld [vmem:[#allocation2 + $0x58] sm:$0xff]
      %v1465 = vld [vmem:[#allocation2 + $0x78] sm:$0xff]
      %v1466 = vld [vmem:[#allocation2 + $0x80] sm:$0xff]
      %v1467 = vld [vmem:[#allocation2 + $0x88] sm:$0xff]
      %v1468 = vld [vmem:[#allocation2 + $0xa8] sm:$0xff]
      %v1469 = vld [vmem:[#allocation2 + $0xb0] sm:$0xff]
      %v1470 = vld [vmem:[#allocation2 + $0xb8] sm:$0xff]
      %1483 = vrot.lane.b32.xlu0 %v1459, 52
      %v1484 = vpop.permute.xlu0 %1483
      %1485 = vrot.lane.b32.xlu0 %v1460, 52
      %v1486 = vpop.permute.xlu0 %1485
      %1487 = vrot.lane.b32.xlu0 %v1461, 52
      %v1488 = vpop.permute.xlu0 %1487
      %1489 = vrot.lane.b32.xlu0 %v1462, 52
      %v1490 = vpop.permute.xlu0 %1489
      %1491 = vrot.lane.b32.xlu0 %v1463, 52
      %v1492 = vpop.permute.xlu0 %1491
      %1493 = vrot.lane.b32.xlu0 %v1464, 52
      %v1494 = vpop.permute.xlu0 %1493
      %1495 = vrot.lane.b32.xlu0 %v1465, 52
      %v1496 = vpop.permute.xlu0 %1495
      %1497 = vrot.lane.b32.xlu0 %v1466, 52
      %v1498 = vpop.permute.xlu0 %1497
      %1499 = vrot.lane.b32.xlu0 %v1467, 52
      %v1500 = vpop.permute.xlu0 %1499
      %1501 = vrot.lane.b32.xlu0 %v1468, 52
      %v1502 = vpop.permute.xlu0 %1501
      %1503 = vrot.lane.b32.xlu0 %v1469, 52
      %v1504 = vpop.permute.xlu0 %1503
      %1505 = vrot.lane.b32.xlu0 %v1470, 52
      %v1506 = vpop.permute.xlu0 %1505
      %v1507 = vsel %vm1112, %v1484, %v1486
      %v1508 = vsel %vm1112, %v1486, %v1488
      %v1509 = vsel %vm1112, %v1490, %v1492
      %v1510 = vsel %vm1112, %v1492, %v1494
      %v1511 = vsel %vm1112, %v1496, %v1498
      %v1512 = vsel %vm1112, %v1498, %v1500
      %v1513 = vsel %vm1112, %v1502, %v1504
      %v1514 = vsel %vm1112, %v1504, %v1506
      %v1523 = vsel %vm228, %v1507, 0.0
      %v1524 = vsel %vm229, %v1508, 0.0
      %v1525 = vsel %vm228, %v1509, 0.0
      %v1526 = vsel %vm229, %v1510, 0.0
      %v1527 = vsel %vm228, %v1511, 0.0
      %v1528 = vsel %vm229, %v1512, 0.0
      %v1529 = vsel %vm228, %v1513, 0.0
      %v1530 = vsel %vm229, %v1514, 0.0
      %1531 = vst [vmem:[#allocation3 + $0x400] sm:$0xff] %v1523
      %1532 = vst [vmem:[#allocation3 + $0x408] sm:$0xff] %v1524
      %1533 = vst [vmem:[#allocation3 + $0x410] sm:$0xff] %v1525
      %1534 = vst [vmem:[#allocation3 + $0x418] sm:$0xff] %v1526
      %1535 = vst [vmem:[#allocation3 + $0x420] sm:$0xff] %v1527
      %1536 = vst [vmem:[#allocation3 + $0x428] sm:$0xff] %v1528
      %1537 = vst [vmem:[#allocation3 + $0x430] sm:$0xff] %v1529
      %1538 = vst [vmem:[#allocation3 + $0x438] sm:$0xff] %v1530
      %v1539 = vld [vmem:[%s1] sm:$0xff]
      %v1540 = vld [vmem:[%s1 + $0x8] sm:$0xff]
      %v1541 = vld [vmem:[%s1 + $0x10] sm:$0xff]
      %v1542 = vld [vmem:[%s1 + $0x18] sm:$0xff]
      %v1543 = vld [vmem:[%s1 + $0x20] sm:$0xff]
      %v1544 = vld [vmem:[#allocation3] sm:$0xff]
      %v1545 = vld [vmem:[#allocation3 + $0x8] sm:$0xff]
      %v1546 = vld [vmem:[#allocation3 + $0x10] sm:$0xff]
      %v1547 = vld [vmem:[#allocation3 + $0x18] sm:$0xff]
      %v1548 = vld [vmem:[#allocation3 + $0x20] sm:$0xff]
      %v1549 = vld [vmem:[#allocation3 + $0x28] sm:$0xff]
      %v1550 = vld [vmem:[#allocation3 + $0x30] sm:$0xff]
      %v1551 = vld [vmem:[#allocation3 + $0x38] sm:$0xff]
      %v1552 = vld [vmem:[#allocation3 + $0x40] sm:$0xff]
      %v1553 = vld [vmem:[#allocation3 + $0x48] sm:$0xff]
      %v1554 = vld [vmem:[#allocation3 + $0x50] sm:$0xff]
      %v1555 = vld [vmem:[#allocation3 + $0x58] sm:$0xff]
      %v1556 = vld [vmem:[#allocation3 + $0x60] sm:$0xff]
      %v1557 = vld [vmem:[#allocation3 + $0x68] sm:$0xff]
      %v1558 = vld [vmem:[#allocation3 + $0x70] sm:$0xff]
      %v1559 = vld [vmem:[#allocation3 + $0x78] sm:$0xff]
      %v1560 = vld [vmem:[#allocation3 + $0x80] sm:$0xff]
      %v1561 = vld [vmem:[#allocation3 + $0x88] sm:$0xff]
      %v1562 = vld [vmem:[#allocation3 + $0x90] sm:$0xff]
      %v1563 = vld [vmem:[#allocation3 + $0x98] sm:$0xff]
      %v1564 = vld [vmem:[#allocation3 + $0xa0] sm:$0xff]
      %v1565 = vld [vmem:[#allocation3 + $0xa8] sm:$0xff]
      %v1566 = vld [vmem:[#allocation3 + $0xb0] sm:$0xff]
      %v1567 = vld [vmem:[#allocation3 + $0xb8] sm:$0xff]
      %v1568 = vld [vmem:[#allocation3 + $0xc0] sm:$0xff]
      %v1569 = vld [vmem:[#allocation3 + $0xc8] sm:$0xff]
      %v1570 = vld [vmem:[#allocation3 + $0xd0] sm:$0xff]
      %v1571 = vld [vmem:[#allocation3 + $0xd8] sm:$0xff]
      %v1572 = vld [vmem:[#allocation3 + $0xe0] sm:$0xff]
      %v1573 = vld [vmem:[#allocation3 + $0xe8] sm:$0xff]
      %v1574 = vld [vmem:[#allocation3 + $0xf0] sm:$0xff]
      %v1575 = vld [vmem:[#allocation3 + $0xf8] sm:$0xff]
      %v1576 = vld [vmem:[#allocation3 + $0x100] sm:$0xff]
      %v1577 = vld [vmem:[#allocation3 + $0x108] sm:$0xff]
      %v1578 = vld [vmem:[#allocation3 + $0x110] sm:$0xff]
      %v1579 = vld [vmem:[#allocation3 + $0x118] sm:$0xff]
      %v1580 = vld [vmem:[#allocation3 + $0x120] sm:$0xff]
      %v1581 = vld [vmem:[#allocation3 + $0x128] sm:$0xff]
      %v1582 = vld [vmem:[#allocation3 + $0x130] sm:$0xff]
      %v1583 = vld [vmem:[#allocation3 + $0x138] sm:$0xff]
      %v1584 = vld [vmem:[#allocation3 + $0x140] sm:$0xff]
      %v1585 = vld [vmem:[#allocation3 + $0x148] sm:$0xff]
      %v1586 = vld [vmem:[#allocation3 + $0x150] sm:$0xff]
      %v1587 = vld [vmem:[#allocation3 + $0x158] sm:$0xff]
      %v1588 = vld [vmem:[#allocation3 + $0x160] sm:$0xff]
      %v1589 = vld [vmem:[#allocation3 + $0x168] sm:$0xff]
      %v1590 = vld [vmem:[#allocation3 + $0x170] sm:$0xff]
      %v1591 = vld [vmem:[#allocation3 + $0x178] sm:$0xff]
      %v1592 = vld [vmem:[#allocation3 + $0x180] sm:$0xff]
      %v1593 = vld [vmem:[#allocation3 + $0x188] sm:$0xff]
      %v1594 = vld [vmem:[#allocation3 + $0x190] sm:$0xff]
      %v1595 = vld [vmem:[#allocation3 + $0x198] sm:$0xff]
      %v1596 = vld [vmem:[#allocation3 + $0x1a0] sm:$0xff]
      %v1597 = vld [vmem:[#allocation3 + $0x1a8] sm:$0xff]
      %v1598 = vld [vmem:[#allocation3 + $0x1b0] sm:$0xff]
      %v1599 = vld [vmem:[#allocation3 + $0x1b8] sm:$0xff]
      %v1600 = vld [vmem:[#allocation3 + $0x1c0] sm:$0xff]
      %v1601 = vld [vmem:[#allocation3 + $0x1c8] sm:$0xff]
      %v1602 = vld [vmem:[#allocation3 + $0x1d0] sm:$0xff]
      %v1603 = vld [vmem:[#allocation3 + $0x1d8] sm:$0xff]
      %v1604 = vld [vmem:[#allocation3 + $0x1e0] sm:$0xff]
      %v1605 = vld [vmem:[#allocation3 + $0x1e8] sm:$0xff]
      %v1606 = vld [vmem:[#allocation3 + $0x1f0] sm:$0xff]
      %v1607 = vld [vmem:[#allocation3 + $0x1f8] sm:$0xff]
      %v1608 = vld [vmem:[#allocation3 + $0x200] sm:$0xff]
      %v1609 = vld [vmem:[#allocation3 + $0x208] sm:$0xff]
      %v1610 = vld [vmem:[#allocation3 + $0x210] sm:$0xff]
      %v1611 = vld [vmem:[#allocation3 + $0x218] sm:$0xff]
      %v1612 = vld [vmem:[#allocation3 + $0x220] sm:$0xff]
      %v1613 = vld [vmem:[#allocation3 + $0x228] sm:$0xff]
      %v1614 = vld [vmem:[#allocation3 + $0x230] sm:$0xff]
      %v1615 = vld [vmem:[#allocation3 + $0x238] sm:$0xff]
      %v1616 = vld [vmem:[#allocation3 + $0x240] sm:$0xff]
      %v1617 = vld [vmem:[#allocation3 + $0x248] sm:$0xff]
      %v1618 = vld [vmem:[#allocation3 + $0x250] sm:$0xff]
      %v1619 = vld [vmem:[#allocation3 + $0x258] sm:$0xff]
      %v1620 = vld [vmem:[#allocation3 + $0x260] sm:$0xff]
      %v1621 = vld [vmem:[#allocation3 + $0x268] sm:$0xff]
      %v1622 = vld [vmem:[#allocation3 + $0x270] sm:$0xff]
      %v1623 = vld [vmem:[#allocation3 + $0x278] sm:$0xff]
      %v1624 = vld [vmem:[#allocation3 + $0x280] sm:$0xff]
      %v1625 = vld [vmem:[#allocation3 + $0x288] sm:$0xff]
      %v1626 = vld [vmem:[#allocation3 + $0x290] sm:$0xff]
      %v1627 = vld [vmem:[#allocation3 + $0x298] sm:$0xff]
      %v1628 = vld [vmem:[#allocation3 + $0x2a0] sm:$0xff]
      %v1629 = vld [vmem:[#allocation3 + $0x2a8] sm:$0xff]
      %v1630 = vld [vmem:[#allocation3 + $0x2b0] sm:$0xff]
      %v1631 = vld [vmem:[#allocation3 + $0x2b8] sm:$0xff]
      %v1632 = vld [vmem:[#allocation3 + $0x2c0] sm:$0xff]
      %v1633 = vld [vmem:[#allocation3 + $0x2c8] sm:$0xff]
      %v1634 = vld [vmem:[#allocation3 + $0x2d0] sm:$0xff]
      %v1635 = vld [vmem:[#allocation3 + $0x2d8] sm:$0xff]
      %v1636 = vld [vmem:[#allocation3 + $0x2e0] sm:$0xff]
      %v1637 = vld [vmem:[#allocation3 + $0x2e8] sm:$0xff]
      %v1638 = vld [vmem:[#allocation3 + $0x2f0] sm:$0xff]
      %v1639 = vld [vmem:[#allocation3 + $0x2f8] sm:$0xff]
      %v1640 = vld [vmem:[#allocation3 + $0x300] sm:$0xff]
      %v1641 = vld [vmem:[#allocation3 + $0x308] sm:$0xff]
      %v1642 = vld [vmem:[#allocation3 + $0x310] sm:$0xff]
      %v1643 = vld [vmem:[#allocation3 + $0x318] sm:$0xff]
      %v1644 = vld [vmem:[#allocation3 + $0x320] sm:$0xff]
      %v1645 = vld [vmem:[#allocation3 + $0x328] sm:$0xff]
      %v1646 = vld [vmem:[#allocation3 + $0x330] sm:$0xff]
      %v1647 = vld [vmem:[#allocation3 + $0x338] sm:$0xff]
      %v1648 = vld [vmem:[#allocation3 + $0x340] sm:$0xff]
      %v1649 = vld [vmem:[#allocation3 + $0x348] sm:$0xff]
      %v1650 = vld [vmem:[#allocation3 + $0x350] sm:$0xff]
      %v1651 = vld [vmem:[#allocation3 + $0x358] sm:$0xff]
      %v1652 = vld [vmem:[#allocation3 + $0x360] sm:$0xff]
      %v1653 = vld [vmem:[#allocation3 + $0x368] sm:$0xff]
      %v1654 = vld [vmem:[#allocation3 + $0x370] sm:$0xff]
      %v1655 = vld [vmem:[#allocation3 + $0x378] sm:$0xff]
      %v1656 = vld [vmem:[#allocation3 + $0x380] sm:$0xff]
      %v1657 = vld [vmem:[#allocation3 + $0x388] sm:$0xff]
      %v1658 = vld [vmem:[#allocation3 + $0x390] sm:$0xff]
      %v1659 = vld [vmem:[#allocation3 + $0x398] sm:$0xff]
      %v1660 = vld [vmem:[#allocation3 + $0x3a0] sm:$0xff]
      %v1661 = vld [vmem:[#allocation3 + $0x3a8] sm:$0xff]
      %v1662 = vld [vmem:[#allocation3 + $0x3b0] sm:$0xff]
      %v1663 = vld [vmem:[#allocation3 + $0x3b8] sm:$0xff]
      %v1664 = vld [vmem:[#allocation3 + $0x3c0] sm:$0xff]
      %v1665 = vld [vmem:[#allocation3 + $0x3c8] sm:$0xff]
      %v1666 = vld [vmem:[#allocation3 + $0x3d0] sm:$0xff]
      %v1667 = vld [vmem:[#allocation3 + $0x3d8] sm:$0xff]
      %v1668 = vld [vmem:[#allocation3 + $0x3e0] sm:$0xff]
      %v1669 = vld [vmem:[#allocation3 + $0x3e8] sm:$0xff]
      %v1670 = vld [vmem:[#allocation3 + $0x3f0] sm:$0xff]
      %v1671 = vld [vmem:[#allocation3 + $0x3f8] sm:$0xff]
      %v1672 = vld [vmem:[#allocation3 + $0x400] sm:$0xff]
      %v1673 = vld [vmem:[#allocation3 + $0x408] sm:$0xff]
      %v1674 = vld [vmem:[#allocation3 + $0x410] sm:$0xff]
      %v1675 = vld [vmem:[#allocation3 + $0x418] sm:$0xff]
      %v1676 = vld [vmem:[#allocation3 + $0x420] sm:$0xff]
      %v1677 = vld [vmem:[#allocation3 + $0x428] sm:$0xff]
      %v1678 = vld [vmem:[#allocation3 + $0x430] sm:$0xff]
      %v1679 = vld [vmem:[#allocation3 + $0x438] sm:$0xff]
      %v1680 = vld [vmem:[%s2] sm:$0xff]
      %1682 = vset.pattern.permute.xlu0 0
      %1683 = vperm.xlu0 %1682, %v1680
      %v1684 = vpop.permute.xlu0 %1683
      %v1687 = vsel %vm804, %v1543, 0
      %1689 = vmatprep.subr.mxu0 %v1545
      %1690 = vmatpush1.msra.mxu0 %v1544
      %1691 = vmatprep.subr.mxu0 %v1547
      %1692 = vmatpush1.msra.mxu0 %v1546
      %1693 = vmatprep.subr.mxu0 %v1549
      %1694 = vmatpush1.msra.mxu0 %v1548
      %1695 = vmatprep.subr.mxu0 %v1551
      %1696 = vmatpush1.msra.mxu0 %v1550
      %1697 = vmatprep.subr.mxu0 %v1553
      %1698 = vmatpush1.msra.mxu0 %v1552
      %1699 = vmatprep.subr.mxu0 %v1555
      %1700 = vmatpush1.msra.mxu0 %v1554
      %1701 = vmatprep.subr.mxu0 %v1557
      %1702 = vmatpush1.msra.mxu0 %v1556
      %1703 = vmatprep.subr.mxu0 %v1559
      %1704 = vmatpush1.msra.mxu0 %v1558
      %1705 = vmatprep.subr.mxu0 %v1561
      %1706 = vmatpush1.msra.mxu0 %v1560
      %1707 = vmatprep.subr.mxu0 %v1563
      %1708 = vmatpush1.msra.mxu0 %v1562
      %1709 = vmatprep.subr.mxu0 %v1565
      %1710 = vmatpush1.msra.mxu0 %v1564
      %1711 = vmatprep.subr.mxu0 %v1567
      %1712 = vmatpush1.msra.mxu0 %v1566
      %1713 = vmatprep.subr.mxu0 %v1569
      %1714 = vmatpush1.msra.mxu0 %v1568
      %1715 = vmatprep.subr.mxu0 %v1571
      %1716 = vmatpush1.msra.mxu0 %v1570
      %1717 = vmatprep.subr.mxu0 %v1573
      %1718 = vmatpush1.msra.mxu0 %v1572
      %1719 = vmatprep.subr.mxu0 %v1575
      %1720 = vmatpush1.msra.mxu0 %v1574
      %1721 = vmatprep.subr.mxu0 %v1577
      %1722 = vmatpush1.msra.mxu0 %v1576
      %1723 = vmatprep.subr.mxu0 %v1579
      %1724 = vmatpush1.msra.mxu0 %v1578
      %1725 = vmatprep.subr.mxu0 %v1581
      %1726 = vmatpush1.msra.mxu0 %v1580
      %1727 = vmatprep.subr.mxu0 %v1583
      %1728 = vmatpush1.msra.mxu0 %v1582
      %1729 = vmatprep.subr.mxu0 %v1585
      %1730 = vmatpush1.msra.mxu0 %v1584
      %1731 = vmatprep.subr.mxu0 %v1587
      %1732 = vmatpush1.msra.mxu0 %v1586
      %1733 = vmatprep.subr.mxu0 %v1589
      %1734 = vmatpush1.msra.mxu0 %v1588
      %1735 = vmatprep.subr.mxu0 %v1591
      %1736 = vmatpush1.msra.mxu0 %v1590
      %1737 = vmatprep.subr.mxu0 %v1593
      %1738 = vmatpush1.msra.mxu0 %v1592
      %1739 = vmatprep.subr.mxu0 %v1595
      %1740 = vmatpush1.msra.mxu0 %v1594
      %1741 = vmatprep.subr.mxu0 %v1597
      %1742 = vmatpush1.msra.mxu0 %v1596
      %1743 = vmatprep.subr.mxu0 %v1599
      %1744 = vmatpush1.msra.mxu0 %v1598
      %1745 = vmatprep.subr.mxu0 %v1601
      %1746 = vmatpush1.msra.mxu0 %v1600
      %1747 = vmatprep.subr.mxu0 %v1603
      %1748 = vmatpush1.msra.mxu0 %v1602
      %1749 = vmatprep.subr.mxu0 %v1605
      %1750 = vmatpush1.msra.mxu0 %v1604
      %1751 = vmatprep.subr.mxu0 %v1607
      %1752 = vmatpush1.msra.mxu0 %v1606
      %1753 = vmatprep.mubr.f32.mxu0 %v1540
      %1754 = vmatmul.mubr.f32.gmra.mrb[0].mxu0 %v1539
      %v1755 = vpop.f32.mrb[0].mxu0
      %v1756 = vadd.f32 %v1684, %v1755
      %v1757 = vpop.f32.mrb[0].mxu0
      %v1758 = vadd.f32 %v1684, %v1757
      %1759 = vdwg.mxu0
      %1760 = vmatprep.subr.mxu0 %v1609
      %1761 = vmatpush1.msra.mxu0 %v1608
      %1762 = vmatprep.subr.mxu0 %v1611
      %1763 = vmatpush1.msra.mxu0 %v1610
      %1764 = vmatprep.subr.mxu0 %v1613
      %1765 = vmatpush1.msra.mxu0 %v1612
      %1766 = vmatprep.subr.mxu0 %v1615
      %1767 = vmatpush1.msra.mxu0 %v1614
      %1768 = vmatprep.subr.mxu0 %v1617
      %1769 = vmatpush1.msra.mxu0 %v1616
      %1770 = vmatprep.subr.mxu0 %v1619
      %1771 = vmatpush1.msra.mxu0 %v1618
      %1772 = vmatprep.subr.mxu0 %v1621
      %1773 = vmatpush1.msra.mxu0 %v1620
      %1774 = vmatprep.subr.mxu0 %v1623
      %1775 = vmatpush1.msra.mxu0 %v1622
      %1776 = vmatprep.subr.mxu0 %v1625
      %1777 = vmatpush1.msra.mxu0 %v1624
      %1778 = vmatprep.subr.mxu0 %v1627
      %1779 = vmatpush1.msra.mxu0 %v1626
      %1780 = vmatprep.subr.mxu0 %v1629
      %1781 = vmatpush1.msra.mxu0 %v1628
      %1782 = vmatprep.subr.mxu0 %v1631
      %1783 = vmatpush1.msra.mxu0 %v1630
      %1784 = vmatprep.subr.mxu0 %v1633
      %1785 = vmatpush1.msra.mxu0 %v1632
      %1786 = vmatprep.subr.mxu0 %v1635
      %1787 = vmatpush1.msra.mxu0 %v1634
      %1788 = vmatprep.subr.mxu0 %v1637
      %1789 = vmatpush1.msra.mxu0 %v1636
      %1790 = vmatprep.subr.mxu0 %v1639
      %1791 = vmatpush1.msra.mxu0 %v1638
      %1792 = vmatprep.subr.mxu0 %v1641
      %1793 = vmatpush1.msra.mxu0 %v1640
      %1794 = vmatprep.subr.mxu0 %v1643
      %1795 = vmatpush1.msra.mxu0 %v1642
      %1796 = vmatprep.subr.mxu0 %v1645
      %1797 = vmatpush1.msra.mxu0 %v1644
      %1798 = vmatprep.subr.mxu0 %v1647
      %1799 = vmatpush1.msra.mxu0 %v1646
      %1800 = vmatprep.subr.mxu0 %v1649
      %1801 = vmatpush1.msra.mxu0 %v1648
      %1802 = vmatprep.subr.mxu0 %v1651
      %1803 = vmatpush1.msra.mxu0 %v1650
      %1804 = vmatprep.subr.mxu0 %v1653
      %1805 = vmatpush1.msra.mxu0 %v1652
      %1806 = vmatprep.subr.mxu0 %v1655
      %1807 = vmatpush1.msra.mxu0 %v1654
      %1808 = vmatprep.subr.mxu0 %v1657
      %1809 = vmatpush1.msra.mxu0 %v1656
      %1810 = vmatprep.subr.mxu0 %v1659
      %1811 = vmatpush1.msra.mxu0 %v1658
      %1812 = vmatprep.subr.mxu0 %v1661
      %1813 = vmatpush1.msra.mxu0 %v1660
      %1814 = vmatprep.subr.mxu0 %v1663
      %1815 = vmatpush1.msra.mxu0 %v1662
      %1816 = vmatprep.subr.mxu0 %v1665
      %1817 = vmatpush1.msra.mxu0 %v1664
      %1818 = vmatprep.subr.mxu0 %v1667
      %1819 = vmatpush1.msra.mxu0 %v1666
      %1820 = vmatprep.subr.mxu0 %v1669
      %1821 = vmatpush1.msra.mxu0 %v1668
      %1822 = vmatprep.subr.mxu0 %v1671
      %1823 = vmatpush1.msra.mxu0 %v1670
      %1824 = vmatprep.mubr.f32.mxu0 %v1542
      %1825 = vmatmul.mubr.f32.gmra.mrb[0].mxu0 %v1541
      %v1826 = vpop.f32.mrb[0].mxu0
      %v1827 = vadd.f32 %v1756, %v1826
      %v1828 = vpop.f32.mrb[0].mxu0
      %v1829 = vadd.f32 %v1758, %v1828
      %1830 = vdwg.mxu0
      %1831 = vmatprep.subr.mxu0 %v1673
      %1832 = vmatpush1.msra.mxu0 %v1672
      %1833 = vmatprep.subr.mxu0 %v1675
      %1834 = vmatpush1.msra.mxu0 %v1674
      %1835 = vmatprep.subr.mxu0 %v1677
      %1836 = vmatpush1.msra.mxu0 %v1676
      %1837 = vmatprep.subr.mxu0 %v1679
      %1838 = vmatpush1.msra.mxu0 %v1678
      %1839 = vmatprep.subr.mxu0 0.0
      %1840 = vmatpush1.msra.mxu0 0.0
      %1841 = vmatprep.subr.mxu0 0.0
      %1842 = vmatpush1.msra.mxu0 0.0
      %1843 = vmatprep.subr.mxu0 0.0
      %1844 = vmatpush1.msra.mxu0 0.0
      %1845 = vmatprep.subr.mxu0 0.0
      %1846 = vmatpush1.msra.mxu0 0.0
      %1847 = vmatprep.subr.mxu0 0.0
      %1848 = vmatpush1.msra.mxu0 0.0
      %1849 = vmatprep.subr.mxu0 0.0
      %1850 = vmatpush1.msra.mxu0 0.0
      %1851 = vmatprep.subr.mxu0 0.0
      %1852 = vmatpush1.msra.mxu0 0.0
      %1853 = vmatprep.subr.mxu0 0.0
      %1854 = vmatpush1.msra.mxu0 0.0
      %1855 = vmatprep.subr.mxu0 0.0
      %1856 = vmatpush1.msra.mxu0 0.0
      %1857 = vmatprep.subr.mxu0 0.0
      %1858 = vmatpush1.msra.mxu0 0.0
      %1859 = vmatprep.subr.mxu0 0.0
      %1860 = vmatpush1.msra.mxu0 0.0
      %1861 = vmatprep.subr.mxu0 0.0
      %1862 = vmatpush1.msra.mxu0 0.0
      %1863 = vmatprep.subr.mxu0 0.0
      %1864 = vmatpush1.msra.mxu0 0.0
      %1865 = vmatprep.subr.mxu0 0.0
      %1866 = vmatpush1.msra.mxu0 0.0
      %1867 = vmatprep.subr.mxu0 0.0
      %1868 = vmatpush1.msra.mxu0 0.0
      %1869 = vmatprep.subr.mxu0 0.0
      %1870 = vmatpush1.msra.mxu0 0.0
      %1871 = vmatprep.subr.mxu0 0.0
      %1872 = vmatpush1.msra.mxu0 0.0
      %1873 = vmatprep.subr.mxu0 0.0
      %1874 = vmatpush1.msra.mxu0 0.0
      %1875 = vmatprep.subr.mxu0 0.0
      %1876 = vmatpush1.msra.mxu0 0.0
      %1877 = vmatprep.subr.mxu0 0.0
      %1878 = vmatpush1.msra.mxu0 0.0
      %1879 = vmatprep.subr.mxu0 0.0
      %1880 = vmatpush1.msra.mxu0 0.0
      %1881 = vmatprep.subr.mxu0 0.0
      %1882 = vmatpush1.msra.mxu0 0.0
      %1883 = vmatprep.subr.mxu0 0.0
      %1884 = vmatpush1.msra.mxu0 0.0
      %1885 = vmatprep.subr.mxu0 0.0
      %1886 = vmatpush1.msra.mxu0 0.0
      %1887 = vmatprep.subr.mxu0 0.0
      %1888 = vmatpush1.msra.mxu0 0.0
      %1889 = vmatprep.subr.mxu0 0.0
      %1890 = vmatpush1.msra.mxu0 0.0
      %1891 = vmatprep.subr.mxu0 0.0
      %1892 = vmatpush1.msra.mxu0 0.0
      %1893 = vmatprep.subr.mxu0 0.0
      %1894 = vmatpush1.msra.mxu0 0.0
      %1895 = vmatprep.mubr.f32.mxu0 0.0
      %1896 = vmatmul.mubr.f32.gmra.mrb[0].mxu0 %v1687
      %v1897 = vpop.f32.mrb[0].mxu0
      %v1898 = vadd.f32 %v1827, %v1897
      %v1899 = vpop.f32.mrb[0].mxu0
      %v1900 = vadd.f32 %v1829, %v1899
      %1901 = vdwg.mxu0
      %1902 = vst [vmem:[%s170] sm:$0xff] %v1898
      %1903 = vst [vmem:[%s170 + $0x8] sm:$0xff] %v1900
      %p1904 = scmp.lt.s32.totalorder %s14, 1
      %s1905 = scalar_select %p1904, %s14, 1
      %s1906 = smul.addr %s1905, 2
      %s1907 = smul.addr %s1906, 8
      %s1908 = scalar_lea.vmem %s3, %s1907
      // Predicated region
      $region33: #{classifier_module_pallas.1} parent=31 // pred_check
        %p1909 = pneg %p100
      $region34: #{classifier_module_pallas.1} parent=31 // pred_check_branch
        %1911 = sbr.rel (%p1909) target = $region36
      $region35: #{classifier_module_pallas.1} parent=31 // pred_region
        _
      $region36: #{classifier_module_pallas.1} parent=31 // pred_fallthru
        _
    $region32: #{classifier_module_pallas.1} parent=5 // pred_fallthru
      _
    %p1912 = scmp.le.s32.totalorder 2, %s9
    // Predicated region
    $region37: #{classifier_module_pallas.1} parent=5 // pred_check
      %p1913 = pneg %p1912
    $region38: #{classifier_module_pallas.1} parent=5 // pred_check_branch
      %1915 = sbr.rel (%p1913) target = $region40
    $region39: #{classifier_module_pallas.1} parent=5 // pred_region
      %s1916 = ssub.s32 %s9, 2
      // Predicated region
      $region41: #{classifier_module_pallas.1} parent=39 // pred_check
        %p1917 = pneg %p106
      $region42: #{classifier_module_pallas.1} parent=39 // pred_check_branch
        %1919 = sbr.rel (%p1917) target = $region44
      $region43: #{classifier_module_pallas.1} parent=39 // pred_region
        %p1920 = scmp.lt.s32.totalorder %s15, 1
        %s1921 = scalar_select %p1920, %s15, 1
        %s1922 = smul.addr %s1921, 2
        %s1923 = smul.addr %s1922, 8
        %s1924 = scalar_lea.vmem %s3, %s1923
      $region44: #{classifier_module_pallas.1} parent=39 // pred_fallthru
        _
    $region40: #{classifier_module_pallas.1} parent=5 // pred_fallthru
      _
  $region6: #{classifier_module_pallas.1} parent=0 // loop_footer
    %s13 = sadd.s32 1, %s9
  $region7: #{classifier_module_pallas.1} parent=0 // loop_footer_branch
    %8 = sbr.rel target = $region3
  $region8: #{classifier_module_pallas.1} parent=0 // loop_exit
    _

</llo_original>
